<compile_context>
chip_gen: v7x
topology: tpu7x:2x2x1
jax: 0.10.0
libtpu: 0.0.40
codegen_flags: <defaults>
</compile_context>

<pallas_src>
import numpy as np
import jax
import jax.numpy as jnp
from jax.experimental import pallas as pl
from jax.experimental.pallas import tpu as pltpu


# --------------------------------------------------------------------------- #
# Pallas kernel: fused seg_head per (batch, H-strip)                           #
#   DWConv3x3+BN+ReLU -> PWConv1x1+BN+ReLU -> 1x1 classifier -> NCHW store     #
# --------------------------------------------------------------------------- #
def _seg_head_kernel(xp_ref, dww_ref, dws_ref, dwb_ref,
                     pww_ref, pws_ref, pwb_ref, fw_ref, fb_ref, o_ref):
    # xp_ref : (1, TH+2, W+2, Cin)  zero-padded strip (halo baked in upstream)
    # dww_ref: (9, Cin)             depthwise 3x3 weights, row = kh*3 + kw
    # dws/dwb: (1, Cin)             folded BN scale / bias after depthwise conv
    # pww_ref: (Cin, Chid)          pointwise (1x1) conv weights
    # pws/pwb: (1, Chid)            folded BN scale / bias after pointwise conv
    # fw_ref : (Chid, NCpad)        final 1x1 conv weights (zero-padded to 128)
    # fb_ref : (1, NCpad)           final 1x1 conv bias   (zero-padded)
    # o_ref  : (1, NC, TH*W)        NCHW output strip, lanes = flattened (h, w)
    th = xp_ref.shape[1] - 2
    w = xp_ref.shape[2] - 2
    cin = xp_ref.shape[3]
    nc = o_ref.shape[1]

    xp = xp_ref[0]                                    # (TH+2, W+2, Cin)

    # Hoist the three W-shifted slabs once (the only unaligned sublane slices),
    # then every tap below is a free major-dim slice + mul-add on the VPU.
    xs = [xp[:, d:d + w, :] for d in range(3)]        # each (TH+2, W, Cin)

    # Depthwise 3x3 conv (stride 1, pad 1): shift-and-accumulate.
    acc = jnp.zeros((th, w, cin), jnp.float32)
    for kh in range(3):
        for kw in range(3):
            acc = acc + xs[kw][kh:kh + th] * dww_ref[kh * 3 + kw, :]

    # Folded BN + ReLU.
    y = jnp.maximum(acc * dws_ref[0] + dwb_ref[0], 0.0)

    # Pointwise 1x1 conv as a channel matmul on the MXU, + folded BN + ReLU.
    # (W % 8 == 0 keeps this reshape a free layout no-op.)
    y2 = y.reshape(th * w, cin)
    z = jnp.dot(y2, pww_ref[...], preferred_element_type=jnp.float32)
    z = jnp.maximum(z * pws_ref[0] + pwb_ref[0], 0.0)

    # Final 1x1 classifier conv (+ bias), padded to a full 128-wide MXU result,
    # then transposed in-kernel so the store is lane-dense NCHW.
    out = jnp.dot(z, fw_ref[...], preferred_element_type=jnp.float32) + fb_ref[0]
    out_t = out.T                                     # (NCpad, TH*W)
    o_ref[0] = out_t[:nc, :].astype(o_ref.dtype)


# --------------------------------------------------------------------------- #
# Glue: align_corners bilinear upsample + concat, with 3x3 halo folded in      #
# --------------------------------------------------------------------------- #
def _bilinear_matrix_np(in_size, out_size):
    """Interp matrix equivalent to nn.Upsample(bilinear, align_corners=True)."""
    src = np.arange(out_size, dtype=np.float64) * (in_size - 1) / max(out_size - 1, 1)
    lo = np.floor(src).astype(np.int64)
    hi = np.minimum(lo + 1, in_size - 1)
    frac = src - lo
    m = np.zeros((out_size, in_size), dtype=np.float64)
    m[np.arange(out_size), lo] += 1.0 - frac
    m[np.arange(out_size), hi] += frac
    return m


def _padded_strip_matrices(in_h, in_w, out_h, out_w, th):
    """Interp matrices that also emit the zero conv-halo and the per-strip row halo."""
    s = out_h // th
    mh = _bilinear_matrix_np(in_h, out_h)
    mh_pad = np.zeros((out_h + 2, in_h), np.float64)
    mh_pad[1:out_h + 1] = mh                           # rows 0 / out_h+1 stay zero
    mh_strips = np.stack([mh_pad[i * th: i * th + th + 2] for i in range(s)], axis=0)
    mw = _bilinear_matrix_np(in_w, out_w)
    mw_pad = np.zeros((out_w + 2, in_w), np.float64)
    mw_pad[1:out_w + 1] = mw
    return jnp.asarray(mh_strips, jnp.float32), jnp.asarray(mw_pad, jnp.float32)


def _upsample_concat_strips(feats_nchw, th):
    """Upsample + concat, emitted directly as zero-padded H-strips (NHWC).

    Returns (N, S, TH+2, W+2, Cin).  The zero halo replaces the old HBM jnp.pad
    round-trip: it is produced by the same einsums that do the upsampling.
    """
    _, _, out_h, out_w = feats_nchw[0].shape
    hi = jax.lax.Precision.HIGHEST
    parts = []
    for f in feats_nchw:
        f = f.astype(jnp.float32)
        _, _, h_i, w_i = f.shape
        mh_s, mw_p = _padded_strip_matrices(h_i, w_i, out_h, out_w, th)
        t = jnp.einsum('srh,nchw->nsrcw', mh_s, f, precision=hi)
        xi = jnp.einsum('qw,nsrcw->nsrqc', mw_p, t, precision=hi)
        parts.append(xi)
    return jnp.concatenate(parts, axis=-1)


def _upsample_concat(feats_nchw):
    """Plain upsample + concat (NHWC), used only by the pure-JAX reference."""
    hi = jax.lax.Precision.HIGHEST
    ups = []
    for i, f in enumerate(feats_nchw):
        x = jnp.transpose(f, (0, 2, 3, 1)).astype(jnp.float32)
        if i > 0:
            s = 2 ** i
            mh = jnp.asarray(_bilinear_matrix_np(x.shape[1], x.shape[1] * s), jnp.float32)
            mw = jnp.asarray(_bilinear_matrix_np(x.shape[2], x.shape[2] * s), jnp.float32)
            x = jnp.einsum('ph,nhwc->npwc', mh, x, precision=hi)
            x = jnp.einsum('qw,npwc->npqc', mw, x, precision=hi)
        ups.append(x)
    return jnp.concatenate(ups, axis=-1)


def _pick_strip_rows(h, w):
    """Pick an H-strip height: divides H, keeps TH*W a multiple of 128, >=2 strips."""
    for th in (16, 8, 32, 64, 128):
        if th < h and h % th == 0 and (th * w) % 128 == 0:
            return th
    return h


def representation_head(feats_nchw, params, th_rows=None):
    """feats_nchw: list of (N, base_ch*2**i, H/2**i, W/2**i). Returns (N, num_class, H, W)."""
    dww, dws, dwb, pww, pws, pwb, fw, fb = params
    n = feats_nchw[0].shape[0]
    h = feats_nchw[0].shape[2]
    w = feats_nchw[0].shape[3]
    th = _pick_strip_rows(h, w) if th_rows is None else th_rows
    assert h % th == 0
    s = h // th

    # Zero-padded strips straight from the (fused) upsample einsums.
    xps = _upsample_concat_strips(feats_nchw, th)       # (N, S, TH+2, W+2, Cin)
    cin = xps.shape[-1]
    xps = xps.reshape(n * s, th + 2, w + 2, cin)        # free row-major merge

    chid = pww.shape[1]
    nc = fw.shape[1]
    nc_pad = ((nc + 127) // 128) * 128                  # full MXU width + clean transpose
    fw_p = jnp.zeros((chid, nc_pad), jnp.float32).at[:, :nc].set(fw)
    fb_p = jnp.zeros((1, nc_pad), jnp.float32).at[:, :nc].set(fb)

    wfull = lambda b, si: (0, 0)                        # whole-array (resident) weights

    out_flat = pl.pallas_call(
        _seg_head_kernel,
        out_shape=jax.ShapeDtypeStruct((n, nc, h * w), jnp.float32),
        grid=(n, s),
        in_specs=[
            pl.BlockSpec((1, th + 2, w + 2, cin), lambda b, si: (b * s + si, 0, 0, 0)),
            pl.BlockSpec((9, cin), wfull),
            pl.BlockSpec((1, cin), wfull),
            pl.BlockSpec((1, cin), wfull),
            pl.BlockSpec((cin, chid), wfull),
            pl.BlockSpec((1, chid), wfull),
            pl.BlockSpec((1, chid), wfull),
            pl.BlockSpec((chid, nc_pad), wfull),
            pl.BlockSpec((1, nc_pad), wfull),
        ],
        # Lane-dense NCHW output: last dim (flattened h*w) is a multiple of 128.
        out_specs=pl.BlockSpec((1, nc, th * w), lambda b, si: (b, 0, si)),
        compiler_params=pltpu.CompilerParams(
            dimension_semantics=("parallel", "parallel"),
            vmem_limit_bytes=32 * 1024 * 1024),
    )(xps, dww, dws, dwb, pww, pws, pwb, fw_p, fb_p)

    return out_flat.reshape(n, nc, h, w)                # free metadata reshape


def init_params(key, base_ch, num_stage, num_class, hid_ch):
    """Deterministic synthetic parameters (eval-mode BN folded to scale/bias)."""
    in_ch = sum(2 ** i for i in range(num_stage)) * base_ch
    ks = jax.random.split(key, 12)
    eps = 1e-5

    # Depthwise 3x3 conv (groups=in_ch, bias=False) + BN.
    dw_w = 0.2 * jax.random.normal(ks[0], (3, 3, in_ch), jnp.float32)
    g1 = 1.0 + 0.1 * jax.random.normal(ks[1], (in_ch,), jnp.float32)
    b1 = 0.1 * jax.random.normal(ks[2], (in_ch,), jnp.float32)
    m1 = 0.05 * jax.random.normal(ks[3], (in_ch,), jnp.float32)
    v1 = 0.5 + jax.random.uniform(ks[4], (in_ch,), jnp.float32)
    dw_scale = g1 / jnp.sqrt(v1 + eps)
    dw_bias = b1 - m1 * dw_scale

    # Pointwise 1x1 conv in_ch -> hid_ch (bias=False) + BN.
    pw_w = 0.2 * jax.random.normal(ks[5], (in_ch, hid_ch), jnp.float32)
    g2 = 1.0 + 0.1 * jax.random.normal(ks[6], (hid_ch,), jnp.float32)
    b2 = 0.1 * jax.random.normal(ks[7], (hid_ch,), jnp.float32)
    m2 = 0.05 * jax.random.normal(ks[8], (hid_ch,), jnp.float32)
    v2 = 0.5 + jax.random.uniform(ks[9], (hid_ch,), jnp.float32)
    pw_scale = g2 / jnp.sqrt(v2 + eps)
    pw_bias = b2 - m2 * pw_scale

    # conv1x1(hid_ch, num_class) = nn.Conv2d(hid_ch, num_class, 1) with bias.
    f_w = 0.2 * jax.random.normal(ks[10], (hid_ch, num_class), jnp.float32)
    f_b = 0.1 * jax.random.normal(ks[11], (num_class,), jnp.float32)

    return (dw_w.reshape(9, in_ch),
            dw_scale.reshape(1, in_ch), dw_bias.reshape(1, in_ch),
            pw_w, pw_scale.reshape(1, hid_ch), pw_bias.reshape(1, hid_ch),
            f_w, f_b.reshape(1, num_class))


def reference_forward(feats_nchw, params):
    """Pure-JAX reference (same math, no Pallas) for a sanity check."""
    x = _upsample_concat(feats_nchw)
    dww, dws, dwb, pww, pws, pwb, fw, fb = params
    n, h, w, cin = x.shape
    xp = jnp.pad(x, ((0, 0), (1, 1), (1, 1), (0, 0)))
    acc = jnp.zeros((n, h, w, cin), jnp.float32)
    for kh in range(3):
        for kw in range(3):
            acc = acc + xp[:, kh:kh + h, kw:kw + w, :] * dww[kh * 3 + kw]
    y = jnp.maximum(acc * dws[0] + dwb[0], 0.0)
    hi = jax.lax.Precision.HIGHEST
    z = jnp.einsum('nhwc,cd->nhwd', y, pww, precision=hi)
    z = jnp.maximum(z * pws[0] + pwb[0], 0.0)
    o = jnp.einsum('nhwc,cd->nhwd', z, fw, precision=hi) + fb[0]
    return jnp.transpose(o, (0, 3, 1, 2))


if __name__ == "__main__":
    # Small shapes consistent with the module:
    #   num_stage=3, base_ch=4 -> in_ch = (1+2+4)*4 = 28; hid_ch=32; num_class=5
    base_ch, num_stage, num_class, hid_ch = 4, 3, 5, 32
    n, h0, w0 = 2, 16, 16

    key = jax.random.PRNGKey(0)
    kf, kp = jax.random.split(key)
    feat_keys = jax.random.split(kf, num_stage)
    feats = [jax.random.normal(feat_keys[i],
                               (n, base_ch * 2 ** i, h0 // 2 ** i, w0 // 2 ** i),
                               jnp.float32)
             for i in range(num_stage)]

    params = init_params(kp, base_ch, num_stage, num_class, hid_ch)

    out = jax.block_until_ready(representation_head(feats, params))
    assert out.shape == (n, num_class, h0, w0)

    ref = jax.block_until_ready(reference_forward(feats, params))
    np.testing.assert_allclose(np.asarray(out), np.asarray(ref),
                               rtol=2e-2, atol=2e-2)
    print("KERNEL_OK")
</pallas_src>

<mosaic_0001>
module attributes {stable_mosaic.version = 11 : i64} {
  func.func @_seg_head_kernel(%arg0: i32, %arg1: i32, %arg2: memref<1x10x18x28xf32, #tpu.memory_space<vmem>>, %arg3: memref<9x28xf32, #tpu.memory_space<vmem>>, %arg4: memref<1x28xf32, #tpu.memory_space<vmem>>, %arg5: memref<1x28xf32, #tpu.memory_space<vmem>>, %arg6: memref<28x32xf32, #tpu.memory_space<vmem>>, %arg7: memref<1x32xf32, #tpu.memory_space<vmem>>, %arg8: memref<1x32xf32, #tpu.memory_space<vmem>>, %arg9: memref<32x128xf32, #tpu.memory_space<vmem>>, %arg10: memref<1x128xf32, #tpu.memory_space<vmem>>, %arg11: memref<1x5x128xf32, #tpu.memory_space<vmem>>) attributes {dimension_semantics = [#tpu.dimension_semantics<parallel>, #tpu.dimension_semantics<parallel>], iteration_bounds = array<i64: 2, 2>, scalar_prefetch = 0 : i64, scratch_operands = 0 : i64, tpu.core_type = #tpu.core_type<tc>, window_params = [{transform_indices = @transform_0, window_bounds = array<i64: 1, 10, 18, 28>}, {pipeline_mode = #tpu.pipeline_mode<synchronous>, transform_indices = @transform_1, window_bounds = array<i64: 9, 28>}, {pipeline_mode = #tpu.pipeline_mode<synchronous>, transform_indices = @transform_2, window_bounds = array<i64: 1, 28>}, {pipeline_mode = #tpu.pipeline_mode<synchronous>, transform_indices = @transform_3, window_bounds = array<i64: 1, 28>}, {pipeline_mode = #tpu.pipeline_mode<synchronous>, transform_indices = @transform_4, window_bounds = array<i64: 28, 32>}, {pipeline_mode = #tpu.pipeline_mode<synchronous>, transform_indices = @transform_5, window_bounds = array<i64: 1, 32>}, {pipeline_mode = #tpu.pipeline_mode<synchronous>, transform_indices = @transform_6, window_bounds = array<i64: 1, 32>}, {pipeline_mode = #tpu.pipeline_mode<synchronous>, transform_indices = @transform_7, window_bounds = array<i64: 32, 128>}, {pipeline_mode = #tpu.pipeline_mode<synchronous>, transform_indices = @transform_8, window_bounds = array<i64: 1, 128>}, {transform_indices = @transform_9, window_bounds = array<i64: 1, 5, 128>}]} {
    %c0 = arith.constant 0 : index
    %c0_0 = arith.constant 0 : index
    %c0_1 = arith.constant 0 : index
    %c0_2 = arith.constant 0 : index
    %0 = vector.load %arg2[%c0, %c0_0, %c0_1, %c0_2] : memref<1x10x18x28xf32, #tpu.memory_space<vmem>>, vector<1x10x18x28xf32>
    %1 = vector.shape_cast %0 : vector<1x10x18x28xf32> to vector<10x18x28xf32>
    %2 = vector.extract_strided_slice %1 {offsets = [0, 0, 0], sizes = [10, 16, 28], strides = [1, 1, 1]} : vector<10x18x28xf32> to vector<10x16x28xf32>
    %3 = vector.extract_strided_slice %1 {offsets = [0, 1, 0], sizes = [10, 16, 28], strides = [1, 1, 1]} : vector<10x18x28xf32> to vector<10x16x28xf32>
    %4 = vector.extract_strided_slice %1 {offsets = [0, 2, 0], sizes = [10, 16, 28], strides = [1, 1, 1]} : vector<10x18x28xf32> to vector<10x16x28xf32>
    %cst = arith.constant 0.000000e+00 : f32
    %5 = vector.broadcast %cst : f32 to vector<8x16x28xf32>
    %6 = vector.extract_strided_slice %2 {offsets = [0, 0, 0], sizes = [8, 16, 28], strides = [1, 1, 1]} : vector<10x16x28xf32> to vector<8x16x28xf32>
    %c0_3 = arith.constant 0 : index
    %c0_4 = arith.constant 0 : index
    %7 = vector.load %arg3[%c0_3, %c0_4] : memref<9x28xf32, #tpu.memory_space<vmem>>, vector<1x28xf32>
    %8 = vector.shape_cast %7 : vector<1x28xf32> to vector<28xf32>
    %9 = vector.shape_cast %8 : vector<28xf32> to vector<1x1x28xf32>
    %10 = vector.broadcast %9 : vector<1x1x28xf32> to vector<8x16x28xf32>
    %11 = arith.mulf %6, %10 : vector<8x16x28xf32>
    %12 = arith.addf %5, %11 : vector<8x16x28xf32>
    %13 = vector.extract_strided_slice %3 {offsets = [0, 0, 0], sizes = [8, 16, 28], strides = [1, 1, 1]} : vector<10x16x28xf32> to vector<8x16x28xf32>
    %c1 = arith.constant 1 : index
    %c0_5 = arith.constant 0 : index
    %14 = vector.load %arg3[%c1, %c0_5] : memref<9x28xf32, #tpu.memory_space<vmem>>, vector<1x28xf32>
    %15 = vector.shape_cast %14 : vector<1x28xf32> to vector<28xf32>
    %16 = vector.shape_cast %15 : vector<28xf32> to vector<1x1x28xf32>
    %17 = vector.broadcast %16 : vector<1x1x28xf32> to vector<8x16x28xf32>
    %18 = arith.mulf %13, %17 : vector<8x16x28xf32>
    %19 = arith.addf %12, %18 : vector<8x16x28xf32>
    %20 = vector.extract_strided_slice %4 {offsets = [0, 0, 0], sizes = [8, 16, 28], strides = [1, 1, 1]} : vector<10x16x28xf32> to vector<8x16x28xf32>
    %c2 = arith.constant 2 : index
    %c0_6 = arith.constant 0 : index
    %21 = vector.load %arg3[%c2, %c0_6] : memref<9x28xf32, #tpu.memory_space<vmem>>, vector<1x28xf32>
    %22 = vector.shape_cast %21 : vector<1x28xf32> to vector<28xf32>
    %23 = vector.shape_cast %22 : vector<28xf32> to vector<1x1x28xf32>
    %24 = vector.broadcast %23 : vector<1x1x28xf32> to vector<8x16x28xf32>
    %25 = arith.mulf %20, %24 : vector<8x16x28xf32>
    %26 = arith.addf %19, %25 : vector<8x16x28xf32>
    %27 = vector.extract_strided_slice %2 {offsets = [1, 0, 0], sizes = [8, 16, 28], strides = [1, 1, 1]} : vector<10x16x28xf32> to vector<8x16x28xf32>
    %c3 = arith.constant 3 : index
    %c0_7 = arith.constant 0 : index
    %28 = vector.load %arg3[%c3, %c0_7] : memref<9x28xf32, #tpu.memory_space<vmem>>, vector<1x28xf32>
    %29 = vector.shape_cast %28 : vector<1x28xf32> to vector<28xf32>
    %30 = vector.shape_cast %29 : vector<28xf32> to vector<1x1x28xf32>
    %31 = vector.broadcast %30 : vector<1x1x28xf32> to vector<8x16x28xf32>
    %32 = arith.mulf %27, %31 : vector<8x16x28xf32>
    %33 = arith.addf %26, %32 : vector<8x16x28xf32>
    %34 = vector.extract_strided_slice %3 {offsets = [1, 0, 0], sizes = [8, 16, 28], strides = [1, 1, 1]} : vector<10x16x28xf32> to vector<8x16x28xf32>
    %c4 = arith.constant 4 : index
    %c0_8 = arith.constant 0 : index
    %35 = vector.load %arg3[%c4, %c0_8] : memref<9x28xf32, #tpu.memory_space<vmem>>, vector<1x28xf32>
    %36 = vector.shape_cast %35 : vector<1x28xf32> to vector<28xf32>
    %37 = vector.shape_cast %36 : vector<28xf32> to vector<1x1x28xf32>
    %38 = vector.broadcast %37 : vector<1x1x28xf32> to vector<8x16x28xf32>
    %39 = arith.mulf %34, %38 : vector<8x16x28xf32>
    %40 = arith.addf %33, %39 : vector<8x16x28xf32>
    %41 = vector.extract_strided_slice %4 {offsets = [1, 0, 0], sizes = [8, 16, 28], strides = [1, 1, 1]} : vector<10x16x28xf32> to vector<8x16x28xf32>
    %c5 = arith.constant 5 : index
    %c0_9 = arith.constant 0 : index
    %42 = vector.load %arg3[%c5, %c0_9] : memref<9x28xf32, #tpu.memory_space<vmem>>, vector<1x28xf32>
    %43 = vector.shape_cast %42 : vector<1x28xf32> to vector<28xf32>
    %44 = vector.shape_cast %43 : vector<28xf32> to vector<1x1x28xf32>
    %45 = vector.broadcast %44 : vector<1x1x28xf32> to vector<8x16x28xf32>
    %46 = arith.mulf %41, %45 : vector<8x16x28xf32>
    %47 = arith.addf %40, %46 : vector<8x16x28xf32>
    %48 = vector.extract_strided_slice %2 {offsets = [2, 0, 0], sizes = [8, 16, 28], strides = [1, 1, 1]} : vector<10x16x28xf32> to vector<8x16x28xf32>
    %c6 = arith.constant 6 : index
    %c0_10 = arith.constant 0 : index
    %49 = vector.load %arg3[%c6, %c0_10] : memref<9x28xf32, #tpu.memory_space<vmem>>, vector<1x28xf32>
    %50 = vector.shape_cast %49 : vector<1x28xf32> to vector<28xf32>
    %51 = vector.shape_cast %50 : vector<28xf32> to vector<1x1x28xf32>
    %52 = vector.broadcast %51 : vector<1x1x28xf32> to vector<8x16x28xf32>
    %53 = arith.mulf %48, %52 : vector<8x16x28xf32>
    %54 = arith.addf %47, %53 : vector<8x16x28xf32>
    %55 = vector.extract_strided_slice %3 {offsets = [2, 0, 0], sizes = [8, 16, 28], strides = [1, 1, 1]} : vector<10x16x28xf32> to vector<8x16x28xf32>
    %c7 = arith.constant 7 : index
    %c0_11 = arith.constant 0 : index
    %56 = vector.load %arg3[%c7, %c0_11] : memref<9x28xf32, #tpu.memory_space<vmem>>, vector<1x28xf32>
    %57 = vector.shape_cast %56 : vector<1x28xf32> to vector<28xf32>
    %58 = vector.shape_cast %57 : vector<28xf32> to vector<1x1x28xf32>
    %59 = vector.broadcast %58 : vector<1x1x28xf32> to vector<8x16x28xf32>
    %60 = arith.mulf %55, %59 : vector<8x16x28xf32>
    %61 = arith.addf %54, %60 : vector<8x16x28xf32>
    %62 = vector.extract_strided_slice %4 {offsets = [2, 0, 0], sizes = [8, 16, 28], strides = [1, 1, 1]} : vector<10x16x28xf32> to vector<8x16x28xf32>
    %c8 = arith.constant 8 : index
    %c0_12 = arith.constant 0 : index
    %63 = vector.load %arg3[%c8, %c0_12] : memref<9x28xf32, #tpu.memory_space<vmem>>, vector<1x28xf32>
    %64 = vector.shape_cast %63 : vector<1x28xf32> to vector<28xf32>
    %65 = vector.shape_cast %64 : vector<28xf32> to vector<1x1x28xf32>
    %66 = vector.broadcast %65 : vector<1x1x28xf32> to vector<8x16x28xf32>
    %67 = arith.mulf %62, %66 : vector<8x16x28xf32>
    %68 = arith.addf %61, %67 : vector<8x16x28xf32>
    %c0_13 = arith.constant 0 : index
    %c0_14 = arith.constant 0 : index
    %69 = vector.load %arg4[%c0_13, %c0_14] : memref<1x28xf32, #tpu.memory_space<vmem>>, vector<1x28xf32>
    %70 = vector.shape_cast %69 : vector<1x28xf32> to vector<28xf32>
    %71 = vector.shape_cast %70 : vector<28xf32> to vector<1x1x28xf32>
    %72 = vector.broadcast %71 : vector<1x1x28xf32> to vector<8x16x28xf32>
    %73 = arith.mulf %68, %72 : vector<8x16x28xf32>
    %c0_15 = arith.constant 0 : index
    %c0_16 = arith.constant 0 : index
    %74 = vector.load %arg5[%c0_15, %c0_16] : memref<1x28xf32, #tpu.memory_space<vmem>>, vector<1x28xf32>
    %75 = vector.shape_cast %74 : vector<1x28xf32> to vector<28xf32>
    %76 = vector.shape_cast %75 : vector<28xf32> to vector<1x1x28xf32>
    %77 = vector.broadcast %76 : vector<1x1x28xf32> to vector<8x16x28xf32>
    %78 = arith.addf %73, %77 : vector<8x16x28xf32>
    %cst_17 = arith.constant 0.000000e+00 : f32
    %79 = vector.broadcast %cst_17 : f32 to vector<8x16x28xf32>
    %80 = arith.maximumf %78, %79 : vector<8x16x28xf32>
    %81 = vector.shape_cast %80 : vector<8x16x28xf32> to vector<128x28xf32>
    %c0_18 = arith.constant 0 : index
    %c0_19 = arith.constant 0 : index
    %82 = vector.load %arg6[%c0_18, %c0_19] : memref<28x32xf32, #tpu.memory_space<vmem>>, vector<28x32xf32>
    %cst_20 = arith.constant dense<0.000000e+00> : vector<128x32xf32>
    %83 = tpu.matmul %81, %82, %cst_20 {dimension_numbers = #tpu.dot_dimension_numbers<[1], [0], [0], [1], [0, 0, 1, 1], [], []>} : vector<128x28xf32>, vector<28x32xf32>, vector<128x32xf32> -> vector<128x32xf32>
    %c0_21 = arith.constant 0 : index
    %c0_22 = arith.constant 0 : index
    %84 = vector.load %arg7[%c0_21, %c0_22] : memref<1x32xf32, #tpu.memory_space<vmem>>, vector<1x32xf32>
    %85 = vector.shape_cast %84 : vector<1x32xf32> to vector<32xf32>
    %86 = vector.shape_cast %85 : vector<32xf32> to vector<1x32xf32>
    %87 = vector.broadcast %86 : vector<1x32xf32> to vector<128x32xf32>
    %88 = arith.mulf %83, %87 : vector<128x32xf32>
    %c0_23 = arith.constant 0 : index
    %c0_24 = arith.constant 0 : index
    %89 = vector.load %arg8[%c0_23, %c0_24] : memref<1x32xf32, #tpu.memory_space<vmem>>, vector<1x32xf32>
    %90 = vector.shape_cast %89 : vector<1x32xf32> to vector<32xf32>
    %91 = vector.shape_cast %90 : vector<32xf32> to vector<1x32xf32>
    %92 = vector.broadcast %91 : vector<1x32xf32> to vector<128x32xf32>
    %93 = arith.addf %88, %92 : vector<128x32xf32>
    %cst_25 = arith.constant 0.000000e+00 : f32
    %94 = vector.broadcast %cst_25 : f32 to vector<128x32xf32>
    %95 = arith.maximumf %93, %94 : vector<128x32xf32>
    %c0_26 = arith.constant 0 : index
    %c0_27 = arith.constant 0 : index
    %96 = vector.load %arg9[%c0_26, %c0_27] : memref<32x128xf32, #tpu.memory_space<vmem>>, vector<32x128xf32>
    %cst_28 = arith.constant dense<0.000000e+00> : vector<128x128xf32>
    %97 = tpu.matmul %95, %96, %cst_28 {dimension_numbers = #tpu.dot_dimension_numbers<[1], [0], [0], [1], [0, 0, 1, 1], [], []>} : vector<128x32xf32>, vector<32x128xf32>, vector<128x128xf32> -> vector<128x128xf32>
    %c0_29 = arith.constant 0 : index
    %c0_30 = arith.constant 0 : index
    %98 = vector.load %arg10[%c0_29, %c0_30] : memref<1x128xf32, #tpu.memory_space<vmem>>, vector<1x128xf32>
    %99 = vector.shape_cast %98 : vector<1x128xf32> to vector<128xf32>
    %100 = vector.shape_cast %99 : vector<128xf32> to vector<1x128xf32>
    %101 = vector.broadcast %100 : vector<1x128xf32> to vector<128x128xf32>
    %102 = arith.addf %97, %101 : vector<128x128xf32>
    %103 = tpu.transpose %102, [1, 0] : vector<128x128xf32> -> vector<128x128xf32>
    %104 = vector.extract_strided_slice %103 {offsets = [0, 0], sizes = [5, 128], strides = [1, 1]} : vector<128x128xf32> to vector<5x128xf32>
    %c0_31 = arith.constant 0 : index
    %c0_32 = arith.constant 0 : index
    %c0_33 = arith.constant 0 : index
    %105 = vector.load %arg11[%c0_31, %c0_32, %c0_33] : memref<1x5x128xf32, #tpu.memory_space<vmem>>, vector<1x5x128xf32>
    %106 = vector.shape_cast %105 : vector<1x5x128xf32> to vector<5x128xf32>
    %107 = vector.shape_cast %104 : vector<5x128xf32> to vector<1x5x128xf32>
    tpu.vector_store %arg11[%c0_31, %c0_32, %c0_33], %107 {strides = array<i32>} : memref<1x5x128xf32, #tpu.memory_space<vmem>>, vector<1x5x128xf32>,
    return
  }
  func.func @transform_0(%arg0: i32, %arg1: i32) -> (i32, i32, i32, i32) {
    %c2_i32 = arith.constant 2 : i32
    %0 = arith.muli %arg0, %c2_i32 : i32
    %1 = arith.addi %0, %arg1 : i32
    %c0_i32 = arith.constant 0 : i32
    %c0_i32_0 = arith.constant 0 : i32
    %c0_i32_1 = arith.constant 0 : i32
    %c0_i32_2 = arith.constant 0 : i32
    return %1, %c0_i32, %c0_i32_0, %c0_i32_1 : i32, i32, i32, i32
  }
  func.func @transform_1(%arg0: i32, %arg1: i32) -> (i32, i32) {
    %c0_i32 = arith.constant 0 : i32
    %c0_i32_0 = arith.constant 0 : i32
    %c0_i32_1 = arith.constant 0 : i32
    return %c0_i32, %c0_i32_0 : i32, i32
  }
  func.func @transform_2(%arg0: i32, %arg1: i32) -> (i32, i32) {
    %c0_i32 = arith.constant 0 : i32
    %c0_i32_0 = arith.constant 0 : i32
    %c0_i32_1 = arith.constant 0 : i32
    return %c0_i32, %c0_i32_0 : i32, i32
  }
  func.func @transform_3(%arg0: i32, %arg1: i32) -> (i32, i32) {
    %c0_i32 = arith.constant 0 : i32
    %c0_i32_0 = arith.constant 0 : i32
    %c0_i32_1 = arith.constant 0 : i32
    return %c0_i32, %c0_i32_0 : i32, i32
  }
  func.func @transform_4(%arg0: i32, %arg1: i32) -> (i32, i32) {
    %c0_i32 = arith.constant 0 : i32
    %c0_i32_0 = arith.constant 0 : i32
    %c0_i32_1 = arith.constant 0 : i32
    return %c0_i32, %c0_i32_0 : i32, i32
  }
  func.func @transform_5(%arg0: i32, %arg1: i32) -> (i32, i32) {
    %c0_i32 = arith.constant 0 : i32
    %c0_i32_0 = arith.constant 0 : i32
    %c0_i32_1 = arith.constant 0 : i32
    return %c0_i32, %c0_i32_0 : i32, i32
  }
  func.func @transform_6(%arg0: i32, %arg1: i32) -> (i32, i32) {
    %c0_i32 = arith.constant 0 : i32
    %c0_i32_0 = arith.constant 0 : i32
    %c0_i32_1 = arith.constant 0 : i32
    return %c0_i32, %c0_i32_0 : i32, i32
  }
  func.func @transform_7(%arg0: i32, %arg1: i32) -> (i32, i32) {
    %c0_i32 = arith.constant 0 : i32
    %c0_i32_0 = arith.constant 0 : i32
    %c0_i32_1 = arith.constant 0 : i32
    return %c0_i32, %c0_i32_0 : i32, i32
  }
  func.func @transform_8(%arg0: i32, %arg1: i32) -> (i32, i32) {
    %c0_i32 = arith.constant 0 : i32
    %c0_i32_0 = arith.constant 0 : i32
    %c0_i32_1 = arith.constant 0 : i32
    return %c0_i32, %c0_i32_0 : i32, i32
  }
  func.func @transform_9(%arg0: i32, %arg1: i32) -> (i32, i32, i32) {
    %c0_i32 = arith.constant 0 : i32
    %c0_i32_0 = arith.constant 0 : i32
    return %arg0, %c0_i32, %arg1 : i32, i32, i32
  }
}

</mosaic_0001>

<llo_original>
// kernel: tpu_custom_call.1
$region0: #{tpu_custom_call.1}
  #allocation0 [shape = 'u32[]', space=smem, size = 0x4, offset = 0x4, fixed_abs, tag = 'smem constant byte address 0x4 - core index']
  #allocation1 [shape = 'u32[144,128]{1,0:T(1,128)}', space=vmem, size = 0x12000, scoped, tag = 'internal scratch']
  %s0 = inlined_call_operand.vmem [shape: f32[4,10,18,28], index: 0, kind: input, shape index: {}]
  %s1 = inlined_call_operand.vmem [shape: f32[9,28], index: 1, kind: input, shape index: {}]
  %s2 = inlined_call_operand.vmem [shape: f32[1,28], index: 2, kind: input, shape index: {}]
  %s3 = inlined_call_operand.vmem [shape: f32[1,28], index: 3, kind: input, shape index: {}]
  %s4 = inlined_call_operand.vmem [shape: f32[28,32], index: 4, kind: input, shape index: {}]
  %s5 = inlined_call_operand.vmem [shape: f32[1,32], index: 5, kind: input, shape index: {}]
  %s6 = inlined_call_operand.vmem [shape: f32[1,32], index: 6, kind: input, shape index: {}]
  %s7 = inlined_call_operand.vmem [shape: f32[32,128], index: 7, kind: input, shape index: {}]
  %s8 = inlined_call_operand.vmem [shape: f32[1,128], index: 8, kind: input, shape index: {}]
  %s9 = inlined_call_operand.vmem [shape: f32[2,5,256], index: 9, kind: output, shape index: {}]
  %s10 = sld [smem:[#allocation0]]
  $region69: #{tpu_custom_call.1} parent=0
    _
  %s12 = ssub.s32 1, %s10
  %s13 = scalar_select 0, %s12, %s10
  loop: start=0, step=1, limit=6
  $region2: #{tpu_custom_call.1} parent=0 // loop_pre_header
    _
  $region3: #{tpu_custom_call.1} parent=0 // loop_header
    %s15 = sphi 0, %s19
    %p16 = scmp.ge.s32.totalorder %s15, 6
    %s22 = sphi 0, %s34
    %s23 = sphi 0, %s30
    %s24 = sphi 0, %s22
    %s25 = sphi 0, %s23
    %s26 = sphi 0, %s24
    %s27 = sphi 0, %s25
    %s41 = sphi 0, %s43
    %s44 = sphi 0, %s41
    %s45 = sphi 0, %s44
    %s61 = sphi 0, %s45
    %s65 = sphi 0, %s65
    %s67 = sphi 0, %s65
    %s68 = sphi 0, %s67
    %s82 = sphi 0, %s68
    %s86 = sphi 0, %s86
    %s88 = sphi 0, %s86
    %s89 = sphi 0, %s88
    %s103 = sphi 0, %s89
    %s107 = sphi 0, %s107
    %s109 = sphi 0, %s107
    %s110 = sphi 0, %s109
    %s124 = sphi 0, %s110
    %s128 = sphi 0, %s128
    %s130 = sphi 0, %s128
    %s131 = sphi 0, %s130
    %s145 = sphi 0, %s131
    %s149 = sphi 0, %s149
    %s151 = sphi 0, %s149
    %s152 = sphi 0, %s151
    %s166 = sphi 0, %s152
    %s170 = sphi 0, %s170
    %s172 = sphi 0, %s170
    %s173 = sphi 0, %s172
    %s187 = sphi 0, %s173
    %s191 = sphi 0, %s191
    %s193 = sphi 0, %s191
    %s194 = sphi 0, %s193
    %s208 = sphi 0, %s194
    %s212 = sphi 0, %s212
    %s214 = sphi 0, %s212
    %s215 = sphi 0, %s214
    %s229 = sphi 0, %s215
    %s237 = sphi 0, %s239
    %s240 = sphi 0, %s237
    %s241 = sphi 0, %s240
    %s257 = sphi 0, %s241
  $region4: #{tpu_custom_call.1} parent=0 // loop_header_branch
    %18 = sbr.rel (%p16) target = $region8
  $region5: #{tpu_custom_call.1} parent=0 // loop_body
    %s20 = ssub.s32 %s15, 1
    %s21 = ssub.s32 %s15, 2
    %s28 = sadd.s32 1, %s23
    %p29 = scmp.ge.s32.totalorder %s28, 2
    %s30 = scalar_select %p29, 0, %s28
    %s31 = sadd.s32 1, %s22
    %s32 = scalar_select %p29, %s31, %s22
    %p33 = scmp.ge.s32.totalorder %s32, 2
    %s34 = scalar_select %p33, 0, %s32
    %s35 = smul.u32 %s22, 2
    %s36 = sadd.s32 %s35, %s23
    %s37 = smul.u32 %s34, 2
    %s38 = sadd.s32 %s37, %s30
    %s39 = ssub.s32 %s36, %s38
    %p40 = scmp.eq.s32.totalorder %s39, 0
    %s42 = sadd.s32 %s41, 1
    %s43 = scalar_select %p40, %s41, %s42
    %p46 = pneg %p40
    %p47 = scmp.eq.s32.totalorder %s15, 3
    %p48 = por %p46, %p47
    %p49 = scmp.ne.s32.totalorder %s41, %s44
    %p50 = scmp.eq.s32.totalorder %s15, 0
    %p51 = por %p49, %p50
    %p52 = scmp.ne.s32.totalorder %s41, %s44
    %p53 = scmp.eq.s32.totalorder %s20, 3
    %p54 = por %p52, %p53
    %p55 = scmp.ne.s32.totalorder %s44, %s45
    %p56 = scmp.eq.s32.totalorder %s20, 0
    %p57 = por %p55, %p56
    %p58 = scmp.ne.s32.totalorder %s44, %s45
    %p59 = scmp.eq.s32.totalorder %s21, 3
    %p60 = por %p58, %p59
    %p62 = scmp.ne.s32.totalorder %s45, %s61
    %p63 = scmp.eq.s32.totalorder %s21, 0
    %p64 = por %p62, %p63
    %s66 = sadd.s32 %s65, 1
    %p69 = scmp.eq.s32.totalorder %s15, 3
    %p70 = scmp.ne.s32.totalorder %s65, %s67
    %p71 = scmp.eq.s32.totalorder %s15, 0
    %p72 = por %p70, %p71
    %p73 = scmp.ne.s32.totalorder %s65, %s67
    %p74 = scmp.eq.s32.totalorder %s20, 3
    %p75 = por %p73, %p74
    %p76 = scmp.ne.s32.totalorder %s67, %s68
    %p77 = scmp.eq.s32.totalorder %s20, 0
    %p78 = por %p76, %p77
    %p79 = scmp.ne.s32.totalorder %s67, %s68
    %p80 = scmp.eq.s32.totalorder %s21, 3
    %p81 = por %p79, %p80
    %p83 = scmp.ne.s32.totalorder %s68, %s82
    %p84 = scmp.eq.s32.totalorder %s21, 0
    %p85 = por %p83, %p84
    %s87 = sadd.s32 %s86, 1
    %p90 = scmp.eq.s32.totalorder %s15, 3
    %p91 = scmp.ne.s32.totalorder %s86, %s88
    %p92 = scmp.eq.s32.totalorder %s15, 0
    %p93 = por %p91, %p92
    %p94 = scmp.ne.s32.totalorder %s86, %s88
    %p95 = scmp.eq.s32.totalorder %s20, 3
    %p96 = por %p94, %p95
    %p97 = scmp.ne.s32.totalorder %s88, %s89
    %p98 = scmp.eq.s32.totalorder %s20, 0
    %p99 = por %p97, %p98
    %p100 = scmp.ne.s32.totalorder %s88, %s89
    %p101 = scmp.eq.s32.totalorder %s21, 3
    %p102 = por %p100, %p101
    %p104 = scmp.ne.s32.totalorder %s89, %s103
    %p105 = scmp.eq.s32.totalorder %s21, 0
    %p106 = por %p104, %p105
    %s108 = sadd.s32 %s107, 1
    %p111 = scmp.eq.s32.totalorder %s15, 3
    %p112 = scmp.ne.s32.totalorder %s107, %s109
    %p113 = scmp.eq.s32.totalorder %s15, 0
    %p114 = por %p112, %p113
    %p115 = scmp.ne.s32.totalorder %s107, %s109
    %p116 = scmp.eq.s32.totalorder %s20, 3
    %p117 = por %p115, %p116
    %p118 = scmp.ne.s32.totalorder %s109, %s110
    %p119 = scmp.eq.s32.totalorder %s20, 0
    %p120 = por %p118, %p119
    %p121 = scmp.ne.s32.totalorder %s109, %s110
    %p122 = scmp.eq.s32.totalorder %s21, 3
    %p123 = por %p121, %p122
    %p125 = scmp.ne.s32.totalorder %s110, %s124
    %p126 = scmp.eq.s32.totalorder %s21, 0
    %p127 = por %p125, %p126
    %s129 = sadd.s32 %s128, 1
    %p132 = scmp.eq.s32.totalorder %s15, 3
    %p133 = scmp.ne.s32.totalorder %s128, %s130
    %p134 = scmp.eq.s32.totalorder %s15, 0
    %p135 = por %p133, %p134
    %p136 = scmp.ne.s32.totalorder %s128, %s130
    %p137 = scmp.eq.s32.totalorder %s20, 3
    %p138 = por %p136, %p137
    %p139 = scmp.ne.s32.totalorder %s130, %s131
    %p140 = scmp.eq.s32.totalorder %s20, 0
    %p141 = por %p139, %p140
    %p142 = scmp.ne.s32.totalorder %s130, %s131
    %p143 = scmp.eq.s32.totalorder %s21, 3
    %p144 = por %p142, %p143
    %p146 = scmp.ne.s32.totalorder %s131, %s145
    %p147 = scmp.eq.s32.totalorder %s21, 0
    %p148 = por %p146, %p147
    %s150 = sadd.s32 %s149, 1
    %p153 = scmp.eq.s32.totalorder %s15, 3
    %p154 = scmp.ne.s32.totalorder %s149, %s151
    %p155 = scmp.eq.s32.totalorder %s15, 0
    %p156 = por %p154, %p155
    %p157 = scmp.ne.s32.totalorder %s149, %s151
    %p158 = scmp.eq.s32.totalorder %s20, 3
    %p159 = por %p157, %p158
    %p160 = scmp.ne.s32.totalorder %s151, %s152
    %p161 = scmp.eq.s32.totalorder %s20, 0
    %p162 = por %p160, %p161
    %p163 = scmp.ne.s32.totalorder %s151, %s152
    %p164 = scmp.eq.s32.totalorder %s21, 3
    %p165 = por %p163, %p164
    %p167 = scmp.ne.s32.totalorder %s152, %s166
    %p168 = scmp.eq.s32.totalorder %s21, 0
    %p169 = por %p167, %p168
    %s171 = sadd.s32 %s170, 1
    %p174 = scmp.eq.s32.totalorder %s15, 3
    %p175 = scmp.ne.s32.totalorder %s170, %s172
    %p176 = scmp.eq.s32.totalorder %s15, 0
    %p177 = por %p175, %p176
    %p178 = scmp.ne.s32.totalorder %s170, %s172
    %p179 = scmp.eq.s32.totalorder %s20, 3
    %p180 = por %p178, %p179
    %p181 = scmp.ne.s32.totalorder %s172, %s173
    %p182 = scmp.eq.s32.totalorder %s20, 0
    %p183 = por %p181, %p182
    %p184 = scmp.ne.s32.totalorder %s172, %s173
    %p185 = scmp.eq.s32.totalorder %s21, 3
    %p186 = por %p184, %p185
    %p188 = scmp.ne.s32.totalorder %s173, %s187
    %p189 = scmp.eq.s32.totalorder %s21, 0
    %p190 = por %p188, %p189
    %s192 = sadd.s32 %s191, 1
    %p195 = scmp.eq.s32.totalorder %s15, 3
    %p196 = scmp.ne.s32.totalorder %s191, %s193
    %p197 = scmp.eq.s32.totalorder %s15, 0
    %p198 = por %p196, %p197
    %p199 = scmp.ne.s32.totalorder %s191, %s193
    %p200 = scmp.eq.s32.totalorder %s20, 3
    %p201 = por %p199, %p200
    %p202 = scmp.ne.s32.totalorder %s193, %s194
    %p203 = scmp.eq.s32.totalorder %s20, 0
    %p204 = por %p202, %p203
    %p205 = scmp.ne.s32.totalorder %s193, %s194
    %p206 = scmp.eq.s32.totalorder %s21, 3
    %p207 = por %p205, %p206
    %p209 = scmp.ne.s32.totalorder %s194, %s208
    %p210 = scmp.eq.s32.totalorder %s21, 0
    %p211 = por %p209, %p210
    %s213 = sadd.s32 %s212, 1
    %p216 = scmp.eq.s32.totalorder %s15, 3
    %p217 = scmp.ne.s32.totalorder %s212, %s214
    %p218 = scmp.eq.s32.totalorder %s15, 0
    %p219 = por %p217, %p218
    %p220 = scmp.ne.s32.totalorder %s212, %s214
    %p221 = scmp.eq.s32.totalorder %s20, 3
    %p222 = por %p220, %p221
    %p223 = scmp.ne.s32.totalorder %s214, %s215
    %p224 = scmp.eq.s32.totalorder %s20, 0
    %p225 = por %p223, %p224
    %p226 = scmp.ne.s32.totalorder %s214, %s215
    %p227 = scmp.eq.s32.totalorder %s21, 3
    %p228 = por %p226, %p227
    %p230 = scmp.ne.s32.totalorder %s215, %s229
    %p231 = scmp.eq.s32.totalorder %s21, 0
    %p232 = por %p230, %p231
    %s233 = ssub.s32 %s22, %s34
    %s234 = ssub.s32 %s23, %s30
    %s235 = sor.u32 %s233, %s234
    %p236 = scmp.eq.s32.totalorder %s235, 0
    %s238 = sadd.s32 %s237, 1
    %s239 = scalar_select %p236, %s237, %s238
    %p242 = pneg %p236
    %p243 = scmp.eq.s32.totalorder %s15, 3
    %p244 = por %p242, %p243
    %p245 = scmp.ne.s32.totalorder %s237, %s240
    %p246 = scmp.eq.s32.totalorder %s15, 0
    %p247 = por %p245, %p246
    %p248 = scmp.ne.s32.totalorder %s237, %s240
    %p249 = scmp.eq.s32.totalorder %s20, 3
    %p250 = por %p248, %p249
    %p251 = scmp.ne.s32.totalorder %s240, %s241
    %p252 = scmp.eq.s32.totalorder %s20, 0
    %p253 = por %p251, %p252
    %p254 = scmp.ne.s32.totalorder %s240, %s241
    %p255 = scmp.eq.s32.totalorder %s21, 3
    %p256 = por %p254, %p255
    %p258 = scmp.ne.s32.totalorder %s241, %s257
    %p259 = scmp.eq.s32.totalorder %s21, 0
    %p260 = por %p258, %p259
    %p261 = scmp.le.s32.totalorder 1, %s15
    %p262 = scmp.lt.s32.totalorder %s15, 5
    %p263 = pnand %p261, %p262
    %p264 = pneg %p263
    // Predicated region
    $region9: #{tpu_custom_call.1} parent=5 // pred_check
      _
    $region10: #{tpu_custom_call.1} parent=5 // pred_check_branch
      %266 = sbr.rel (%p263) target = $region12
    $region11: #{tpu_custom_call.1} parent=5 // pred_region
      %s267 = ssub.s32 %s15, 1
      // Predicated region
      $region13: #{tpu_custom_call.1} parent=11 // pred_check
        %p268 = pneg %p78
      $region14: #{tpu_custom_call.1} parent=11 // pred_check_branch
        %270 = sbr.rel (%p268) target = $region16
      $region15: #{tpu_custom_call.1} parent=11 // pred_region
        _
      $region16: #{tpu_custom_call.1} parent=11 // pred_fallthru
        _
      // Predicated region
      $region17: #{tpu_custom_call.1} parent=11 // pred_check
        %p271 = pneg %p99
      $region18: #{tpu_custom_call.1} parent=11 // pred_check_branch
        %273 = sbr.rel (%p271) target = $region20
      $region19: #{tpu_custom_call.1} parent=11 // pred_region
        _
      $region20: #{tpu_custom_call.1} parent=11 // pred_fallthru
        _
      // Predicated region
      $region21: #{tpu_custom_call.1} parent=11 // pred_check
        %p274 = pneg %p120
      $region22: #{tpu_custom_call.1} parent=11 // pred_check_branch
        %276 = sbr.rel (%p274) target = $region24
      $region23: #{tpu_custom_call.1} parent=11 // pred_region
        _
      $region24: #{tpu_custom_call.1} parent=11 // pred_fallthru
        _
      // Predicated region
      $region25: #{tpu_custom_call.1} parent=11 // pred_check
        %p277 = pneg %p141
      $region26: #{tpu_custom_call.1} parent=11 // pred_check_branch
        %279 = sbr.rel (%p277) target = $region28
      $region27: #{tpu_custom_call.1} parent=11 // pred_region
        _
      $region28: #{tpu_custom_call.1} parent=11 // pred_fallthru
        _
      // Predicated region
      $region29: #{tpu_custom_call.1} parent=11 // pred_check
        %p280 = pneg %p162
      $region30: #{tpu_custom_call.1} parent=11 // pred_check_branch
        %282 = sbr.rel (%p280) target = $region32
      $region31: #{tpu_custom_call.1} parent=11 // pred_region
        _
      $region32: #{tpu_custom_call.1} parent=11 // pred_fallthru
        _
      // Predicated region
      $region33: #{tpu_custom_call.1} parent=11 // pred_check
        %p283 = pneg %p183
      $region34: #{tpu_custom_call.1} parent=11 // pred_check_branch
        %285 = sbr.rel (%p283) target = $region36
      $region35: #{tpu_custom_call.1} parent=11 // pred_region
        _
      $region36: #{tpu_custom_call.1} parent=11 // pred_fallthru
        _
      // Predicated region
      $region37: #{tpu_custom_call.1} parent=11 // pred_check
        %p286 = pneg %p204
      $region38: #{tpu_custom_call.1} parent=11 // pred_check_branch
        %288 = sbr.rel (%p286) target = $region40
      $region39: #{tpu_custom_call.1} parent=11 // pred_region
        _
      $region40: #{tpu_custom_call.1} parent=11 // pred_fallthru
        _
      // Predicated region
      $region41: #{tpu_custom_call.1} parent=11 // pred_check
        %p289 = pneg %p225
      $region42: #{tpu_custom_call.1} parent=11 // pred_check_branch
        %291 = sbr.rel (%p289) target = $region44
      $region43: #{tpu_custom_call.1} parent=11 // pred_region
        _
      $region44: #{tpu_custom_call.1} parent=11 // pred_fallthru
        _
    $region12: #{tpu_custom_call.1} parent=5 // pred_fallthru
      _
    %p292 = scmp.lt.s32.totalorder %s15, 4
    // Predicated region
    $region45: #{tpu_custom_call.1} parent=5 // pred_check
      %p293 = pneg %p292
    $region46: #{tpu_custom_call.1} parent=5 // pred_check_branch
      %295 = sbr.rel (%p293) target = $region48
    $region47: #{tpu_custom_call.1} parent=5 // pred_region
      // Predicated region
      $region49: #{tpu_custom_call.1} parent=47 // pred_check
        %p296 = pneg %p51
      $region50: #{tpu_custom_call.1} parent=47 // pred_check_branch
        %298 = sbr.rel (%p296) target = $region52
      $region51: #{tpu_custom_call.1} parent=47 // pred_region
        %s299 = smul.u32 %s22, 2
        %s300 = sadd.s32 %s299, %s23
        %p301 = scmp.lt.s32.totalorder %s300, 3
        %s302 = scalar_select %p301, %s300, 3
        %s303 = smul.addr %s302, 30
        %s304 = smul.addr %s303, 8
        %s305 = scalar_lea.vmem %s0, %s304
        %s306 = smul.u32 %s22, 2
        %s307 = sadd.s32 %s306, %s23
      $region52: #{tpu_custom_call.1} parent=47 // pred_fallthru
        _
    $region48: #{tpu_custom_call.1} parent=5 // pred_fallthru
      _
    %p308 = scmp.le.s32.totalorder 1, %s15
    %p309 = scmp.lt.s32.totalorder %s15, 5
    %p310 = pnand %p308, %p309
    %p311 = pneg %p310
    // Predicated region
    $region53: #{tpu_custom_call.1} parent=5 // pred_check
      _
    $region54: #{tpu_custom_call.1} parent=5 // pred_check_branch
      %313 = sbr.rel (%p310) target = $region56
    $region55: #{tpu_custom_call.1} parent=5 // pred_region
      %s314 = ssub.s32 %s15, 1
      %s315 = smul.u32 %s24, 2
      %s316 = sadd.s32 %s315, %s25
      %p317 = scmp.lt.s32.totalorder %s316, 3
      %s318 = scalar_select %p317, %s316, 3
      %s319 = smul.addr %s318, 30
      %s320 = smul.addr %s319, 8
      %s321 = scalar_lea.vmem %s0, %s320
      %p322 = pneg %p57
      %p323 = pneg %p54
      %p324 = pneg %p78
      %p325 = pneg %p75
      %p326 = pneg %p99
      %p327 = pneg %p96
      %p328 = pneg %p120
      %p329 = pneg %p117
      %p330 = pneg %p141
      %p331 = pneg %p138
      %p332 = pneg %p162
      %p333 = pneg %p159
      %p334 = pneg %p183
      %p335 = pneg %p180
      %p336 = pneg %p204
      %p337 = pneg %p201
      %p338 = pneg %p225
      %p339 = pneg %p222
      %p340 = pneg %p253
      %p341 = pneg %p250
      %p342 = scmp.lt.s32.totalorder %s24, 1
      %s343 = scalar_select %p342, %s24, 1
      %p344 = scmp.lt.s32.totalorder %s25, 1
      %s345 = scalar_select %p344, %s25, 1
      %s346 = smul.addr %s343, 2
      %s347 = sadd.s32 %s345, %s346
      %s348 = smul.addr %s347, 8
      %s349 = scalar_lea.vmem %s9, %s348
      %s350 = smul.u32 %s24, 2
      %s351 = sadd.s32 %s350, %s25
      %p352 = scmp.lt.s32.totalorder %s351, 3
      %s353 = scalar_select %p352, %s351, 3
      %s354 = smul.addr %s353, 30
      %s355 = smul.addr %s354, 8
      %s356 = scalar_lea.vmem %s0, %s355
      %s357 = smul.u32 %s24, 2
      %s358 = sadd.s32 %s357, %s25
      %p359 = scmp.lt.s32.totalorder %s24, 1
      %s360 = scalar_select %p359, %s24, 1
      %p361 = scmp.lt.s32.totalorder %s25, 1
      %s362 = scalar_select %p361, %s25, 1
      %s363 = smul.addr %s360, 2
      %s364 = sadd.s32 %s362, %s363
      %s365 = smul.addr %s364, 8
      %s366 = scalar_lea.vmem %s9, %s365
      %v367 = vld [vmem:[%s356] sm:$0xff]
      %v368 = vld [vmem:[%s356 + $0x8] sm:$0xff]
      %v369 = vld [vmem:[%s356 + $0x10] sm:$0x3]
      %v370 = vld [vmem:[%s356 + $0x18] sm:$0xff]
      %v371 = vld [vmem:[%s356 + $0x20] sm:$0xff]
      %v372 = vld [vmem:[%s356 + $0x28] sm:$0x3]
      %v373 = vld [vmem:[%s356 + $0x30] sm:$0xff]
      %v374 = vld [vmem:[%s356 + $0x38] sm:$0xff]
      %v375 = vld [vmem:[%s356 + $0x40] sm:$0x3]
      %v376 = vld [vmem:[%s356 + $0x48] sm:$0xff]
      %v377 = vld [vmem:[%s356 + $0x50] sm:$0xff]
      %v378 = vld [vmem:[%s356 + $0x58] sm:$0x3]
      %v379 = vld [vmem:[%s356 + $0x60] sm:$0xff]
      %v380 = vld [vmem:[%s356 + $0x68] sm:$0xff]
      %v381 = vld [vmem:[%s356 + $0x70] sm:$0x3]
      %v382 = vld [vmem:[%s356 + $0x78] sm:$0xff]
      %v383 = vld [vmem:[%s356 + $0x80] sm:$0xff]
      %v384 = vld [vmem:[%s356 + $0x88] sm:$0x3]
      %v385 = vld [vmem:[%s356 + $0x90] sm:$0xff]
      %v386 = vld [vmem:[%s356 + $0x98] sm:$0xff]
      %v387 = vld [vmem:[%s356 + $0xa0] sm:$0x3]
      %v388 = vld [vmem:[%s356 + $0xa8] sm:$0xff]
      %v389 = vld [vmem:[%s356 + $0xb0] sm:$0xff]
      %v390 = vld [vmem:[%s356 + $0xb8] sm:$0x3]
      %v391 = vld [vmem:[%s356 + $0xc0] sm:$0xff]
      %v392 = vld [vmem:[%s356 + $0xc8] sm:$0xff]
      %v393 = vld [vmem:[%s356 + $0xd0] sm:$0x3]
      %v394 = vld [vmem:[%s356 + $0xd8] sm:$0xff]
      %v395 = vld [vmem:[%s356 + $0xe0] sm:$0xff]
      %v396 = vld [vmem:[%s356 + $0xe8] sm:$0x3]
      %v397 = vld [vmem:[%s1] sm:$0x1]
      %v398 = vlaneseq
      %v399 = vshrl.u32 %v398, 7
      %v400 = vsub.s32 0, %v399
      %v401 = vrot.slane %v397, %v400
      %v402 = vmul.f32 %v367, %v401
      %v403 = vmul.f32 %v368, %v401
      %v404 = vmul.f32 %v370, %v401
      %v405 = vmul.f32 %v371, %v401
      %v406 = vmul.f32 %v373, %v401
      %v407 = vmul.f32 %v374, %v401
      %v408 = vmul.f32 %v376, %v401
      %v409 = vmul.f32 %v377, %v401
      %v410 = vmul.f32 %v379, %v401
      %v411 = vmul.f32 %v380, %v401
      %v412 = vmul.f32 %v382, %v401
      %v413 = vmul.f32 %v383, %v401
      %v414 = vmul.f32 %v385, %v401
      %v415 = vmul.f32 %v386, %v401
      %v416 = vmul.f32 %v388, %v401
      %v417 = vmul.f32 %v389, %v401
      %v418 = vadd.f32 %v402, 0.0
      %v419 = vadd.f32 %v403, 0.0
      %v420 = vadd.f32 %v404, 0.0
      %v421 = vadd.f32 %v405, 0.0
      %v422 = vadd.f32 %v406, 0.0
      %v423 = vadd.f32 %v407, 0.0
      %v424 = vadd.f32 %v408, 0.0
      %v425 = vadd.f32 %v409, 0.0
      %v426 = vadd.f32 %v410, 0.0
      %v427 = vadd.f32 %v411, 0.0
      %v428 = vadd.f32 %v412, 0.0
      %v429 = vadd.f32 %v413, 0.0
      %v430 = vadd.f32 %v414, 0.0
      %v431 = vadd.f32 %v415, 0.0
      %v432 = vadd.f32 %v416, 0.0
      %v433 = vadd.f32 %v417, 0.0
      %v434 = vld [vmem:[%s1 + $0x1] sm:$0x1]
      %v435 = vlaneseq
      %v436 = vshrl.u32 %v435, 7
      %v437 = vsub.s32 0, %v436
      %v438 = vrot.slane %v434, %v437
      %v439 = vmul.f32 %v367, %v438
      %v440 = vmul.f32 %v368, %v438
      %v441 = vmul.f32 %v369, %v438
      %v442 = vmul.f32 %v370, %v438
      %v443 = vmul.f32 %v371, %v438
      %v444 = vmul.f32 %v372, %v438
      %v445 = vmul.f32 %v373, %v438
      %v446 = vmul.f32 %v374, %v438
      %v447 = vmul.f32 %v375, %v438
      %v448 = vmul.f32 %v376, %v438
      %v449 = vmul.f32 %v377, %v438
      %v450 = vmul.f32 %v378, %v438
      %v451 = vmul.f32 %v379, %v438
      %v452 = vmul.f32 %v380, %v438
      %v453 = vmul.f32 %v381, %v438
      %v454 = vmul.f32 %v382, %v438
      %v455 = vmul.f32 %v383, %v438
      %v456 = vmul.f32 %v384, %v438
      %v457 = vmul.f32 %v385, %v438
      %v458 = vmul.f32 %v386, %v438
      %v459 = vmul.f32 %v387, %v438
      %v460 = vmul.f32 %v388, %v438
      %v461 = vmul.f32 %v389, %v438
      %v462 = vmul.f32 %v390, %v438
      %vm487 = vcmask 1046528
      %v488 = vrot.slane %v439, 1
      %v489 = vrot.slane %v440, 1
      %v490 = vsel %vm487, %v488, %v489
      %v491 = vrot.slane %v441, 1
      %v492 = vsel %vm487, %v489, %v491
      %v493 = vrot.slane %v442, 1
      %v494 = vrot.slane %v443, 1
      %v495 = vsel %vm487, %v493, %v494
      %v496 = vrot.slane %v444, 1
      %v497 = vsel %vm487, %v494, %v496
      %v498 = vrot.slane %v445, 1
      %v499 = vrot.slane %v446, 1
      %v500 = vsel %vm487, %v498, %v499
      %v501 = vrot.slane %v447, 1
      %v502 = vsel %vm487, %v499, %v501
      %v503 = vrot.slane %v448, 1
      %v504 = vrot.slane %v449, 1
      %v505 = vsel %vm487, %v503, %v504
      %v506 = vrot.slane %v450, 1
      %v507 = vsel %vm487, %v504, %v506
      %v508 = vrot.slane %v451, 1
      %v509 = vrot.slane %v452, 1
      %v510 = vsel %vm487, %v508, %v509
      %v511 = vrot.slane %v453, 1
      %v512 = vsel %vm487, %v509, %v511
      %v513 = vrot.slane %v454, 1
      %v514 = vrot.slane %v455, 1
      %v515 = vsel %vm487, %v513, %v514
      %v516 = vrot.slane %v456, 1
      %v517 = vsel %vm487, %v514, %v516
      %v518 = vrot.slane %v457, 1
      %v519 = vrot.slane %v458, 1
      %v520 = vsel %vm487, %v518, %v519
      %v521 = vrot.slane %v459, 1
      %v522 = vsel %vm487, %v519, %v521
      %v523 = vrot.slane %v460, 1
      %v524 = vrot.slane %v461, 1
      %v525 = vsel %vm487, %v523, %v524
      %v526 = vrot.slane %v462, 1
      %v527 = vsel %vm487, %v524, %v526
      %v544 = vadd.f32 %v418, %v490
      %v545 = vadd.f32 %v419, %v492
      %v546 = vadd.f32 %v420, %v495
      %v547 = vadd.f32 %v421, %v497
      %v548 = vadd.f32 %v422, %v500
      %v549 = vadd.f32 %v423, %v502
      %v550 = vadd.f32 %v424, %v505
      %v551 = vadd.f32 %v425, %v507
      %v552 = vadd.f32 %v426, %v510
      %v553 = vadd.f32 %v427, %v512
      %v554 = vadd.f32 %v428, %v515
      %v555 = vadd.f32 %v429, %v517
      %v556 = vadd.f32 %v430, %v520
      %v557 = vadd.f32 %v431, %v522
      %v558 = vadd.f32 %v432, %v525
      %v559 = vadd.f32 %v433, %v527
      %v560 = vld [vmem:[%s1 + $0x2] sm:$0x1]
      %v561 = vlaneseq
      %v562 = vshrl.u32 %v561, 7
      %v563 = vsub.s32 0, %v562
      %v564 = vrot.slane %v560, %v563
      %v565 = vmul.f32 %v367, %v564
      %v566 = vmul.f32 %v368, %v564
      %v567 = vmul.f32 %v369, %v564
      %v568 = vmul.f32 %v370, %v564
      %v569 = vmul.f32 %v371, %v564
      %v570 = vmul.f32 %v372, %v564
      %v571 = vmul.f32 %v373, %v564
      %v572 = vmul.f32 %v374, %v564
      %v573 = vmul.f32 %v375, %v564
      %v574 = vmul.f32 %v376, %v564
      %v575 = vmul.f32 %v377, %v564
      %v576 = vmul.f32 %v378, %v564
      %v577 = vmul.f32 %v379, %v564
      %v578 = vmul.f32 %v380, %v564
      %v579 = vmul.f32 %v381, %v564
      %v580 = vmul.f32 %v382, %v564
      %v581 = vmul.f32 %v383, %v564
      %v582 = vmul.f32 %v384, %v564
      %v583 = vmul.f32 %v385, %v564
      %v584 = vmul.f32 %v386, %v564
      %v585 = vmul.f32 %v387, %v564
      %v586 = vmul.f32 %v388, %v564
      %v587 = vmul.f32 %v389, %v564
      %v588 = vmul.f32 %v390, %v564
      %vm613 = vcmask 1045504
      %v614 = vrot.slane %v565, 2
      %v615 = vrot.slane %v566, 2
      %v616 = vsel %vm613, %v614, %v615
      %v617 = vrot.slane %v567, 2
      %v618 = vsel %vm613, %v615, %v617
      %v619 = vrot.slane %v568, 2
      %v620 = vrot.slane %v569, 2
      %v621 = vsel %vm613, %v619, %v620
      %v622 = vrot.slane %v570, 2
      %v623 = vsel %vm613, %v620, %v622
      %v624 = vrot.slane %v571, 2
      %v625 = vrot.slane %v572, 2
      %v626 = vsel %vm613, %v624, %v625
      %v627 = vrot.slane %v573, 2
      %v628 = vsel %vm613, %v625, %v627
      %v629 = vrot.slane %v574, 2
      %v630 = vrot.slane %v575, 2
      %v631 = vsel %vm613, %v629, %v630
      %v632 = vrot.slane %v576, 2
      %v633 = vsel %vm613, %v630, %v632
      %v634 = vrot.slane %v577, 2
      %v635 = vrot.slane %v578, 2
      %v636 = vsel %vm613, %v634, %v635
      %v637 = vrot.slane %v579, 2
      %v638 = vsel %vm613, %v635, %v637
      %v639 = vrot.slane %v580, 2
      %v640 = vrot.slane %v581, 2
      %v641 = vsel %vm613, %v639, %v640
      %v642 = vrot.slane %v582, 2
      %v643 = vsel %vm613, %v640, %v642
      %v644 = vrot.slane %v583, 2
      %v645 = vrot.slane %v584, 2
      %v646 = vsel %vm613, %v644, %v645
      %v647 = vrot.slane %v585, 2
      %v648 = vsel %vm613, %v645, %v647
      %v649 = vrot.slane %v586, 2
      %v650 = vrot.slane %v587, 2
      %v651 = vsel %vm613, %v649, %v650
      %v652 = vrot.slane %v588, 2
      %v653 = vsel %vm613, %v650, %v652
      %v670 = vadd.f32 %v544, %v616
      %v671 = vadd.f32 %v545, %v618
      %v672 = vadd.f32 %v546, %v621
      %v673 = vadd.f32 %v547, %v623
      %v674 = vadd.f32 %v548, %v626
      %v675 = vadd.f32 %v549, %v628
      %v676 = vadd.f32 %v550, %v631
      %v677 = vadd.f32 %v551, %v633
      %v678 = vadd.f32 %v552, %v636
      %v679 = vadd.f32 %v553, %v638
      %v680 = vadd.f32 %v554, %v641
      %v681 = vadd.f32 %v555, %v643
      %v682 = vadd.f32 %v556, %v646
      %v683 = vadd.f32 %v557, %v648
      %v684 = vadd.f32 %v558, %v651
      %v685 = vadd.f32 %v559, %v653
      %v686 = vld [vmem:[%s1 + $0x3] sm:$0x1]
      %v687 = vlaneseq
      %v688 = vshrl.u32 %v687, 7
      %v689 = vsub.s32 0, %v688
      %v690 = vrot.slane %v686, %v689
      %v691 = vmul.f32 %v370, %v690
      %v692 = vmul.f32 %v371, %v690
      %v693 = vmul.f32 %v373, %v690
      %v694 = vmul.f32 %v374, %v690
      %v695 = vmul.f32 %v376, %v690
      %v696 = vmul.f32 %v377, %v690
      %v697 = vmul.f32 %v379, %v690
      %v698 = vmul.f32 %v380, %v690
      %v699 = vmul.f32 %v382, %v690
      %v700 = vmul.f32 %v383, %v690
      %v701 = vmul.f32 %v385, %v690
      %v702 = vmul.f32 %v386, %v690
      %v703 = vmul.f32 %v388, %v690
      %v704 = vmul.f32 %v389, %v690
      %v705 = vmul.f32 %v391, %v690
      %v706 = vmul.f32 %v392, %v690
      %v707 = vadd.f32 %v670, %v691
      %v708 = vadd.f32 %v671, %v692
      %v709 = vadd.f32 %v672, %v693
      %v710 = vadd.f32 %v673, %v694
      %v711 = vadd.f32 %v674, %v695
      %v712 = vadd.f32 %v675, %v696
      %v713 = vadd.f32 %v676, %v697
      %v714 = vadd.f32 %v677, %v698
      %v715 = vadd.f32 %v678, %v699
      %v716 = vadd.f32 %v679, %v700
      %v717 = vadd.f32 %v680, %v701
      %v718 = vadd.f32 %v681, %v702
      %v719 = vadd.f32 %v682, %v703
      %v720 = vadd.f32 %v683, %v704
      %v721 = vadd.f32 %v684, %v705
      %v722 = vadd.f32 %v685, %v706
      %v723 = vld [vmem:[%s1 + $0x4] sm:$0x1]
      %v724 = vlaneseq
      %v725 = vshrl.u32 %v724, 7
      %v726 = vsub.s32 0, %v725
      %v727 = vrot.slane %v723, %v726
      %v728 = vmul.f32 %v370, %v727
      %v729 = vmul.f32 %v371, %v727
      %v730 = vmul.f32 %v372, %v727
      %v731 = vmul.f32 %v373, %v727
      %v732 = vmul.f32 %v374, %v727
      %v733 = vmul.f32 %v375, %v727
      %v734 = vmul.f32 %v376, %v727
      %v735 = vmul.f32 %v377, %v727
      %v736 = vmul.f32 %v378, %v727
      %v737 = vmul.f32 %v379, %v727
      %v738 = vmul.f32 %v380, %v727
      %v739 = vmul.f32 %v381, %v727
      %v740 = vmul.f32 %v382, %v727
      %v741 = vmul.f32 %v383, %v727
      %v742 = vmul.f32 %v384, %v727
      %v743 = vmul.f32 %v385, %v727
      %v744 = vmul.f32 %v386, %v727
      %v745 = vmul.f32 %v387, %v727
      %v746 = vmul.f32 %v388, %v727
      %v747 = vmul.f32 %v389, %v727
      %v748 = vmul.f32 %v390, %v727
      %v749 = vmul.f32 %v391, %v727
      %v750 = vmul.f32 %v392, %v727
      %v751 = vmul.f32 %v393, %v727
      %v776 = vrot.slane %v728, 1
      %v777 = vrot.slane %v729, 1
      %v778 = vsel %vm487, %v776, %v777
      %v779 = vrot.slane %v730, 1
      %v780 = vsel %vm487, %v777, %v779
      %v781 = vrot.slane %v731, 1
      %v782 = vrot.slane %v732, 1
      %v783 = vsel %vm487, %v781, %v782
      %v784 = vrot.slane %v733, 1
      %v785 = vsel %vm487, %v782, %v784
      %v786 = vrot.slane %v734, 1
      %v787 = vrot.slane %v735, 1
      %v788 = vsel %vm487, %v786, %v787
      %v789 = vrot.slane %v736, 1
      %v790 = vsel %vm487, %v787, %v789
      %v791 = vrot.slane %v737, 1
      %v792 = vrot.slane %v738, 1
      %v793 = vsel %vm487, %v791, %v792
      %v794 = vrot.slane %v739, 1
      %v795 = vsel %vm487, %v792, %v794
      %v796 = vrot.slane %v740, 1
      %v797 = vrot.slane %v741, 1
      %v798 = vsel %vm487, %v796, %v797
      %v799 = vrot.slane %v742, 1
      %v800 = vsel %vm487, %v797, %v799
      %v801 = vrot.slane %v743, 1
      %v802 = vrot.slane %v744, 1
      %v803 = vsel %vm487, %v801, %v802
      %v804 = vrot.slane %v745, 1
      %v805 = vsel %vm487, %v802, %v804
      %v806 = vrot.slane %v746, 1
      %v807 = vrot.slane %v747, 1
      %v808 = vsel %vm487, %v806, %v807
      %v809 = vrot.slane %v748, 1
      %v810 = vsel %vm487, %v807, %v809
      %v811 = vrot.slane %v749, 1
      %v812 = vrot.slane %v750, 1
      %v813 = vsel %vm487, %v811, %v812
      %v814 = vrot.slane %v751, 1
      %v815 = vsel %vm487, %v812, %v814
      %v832 = vadd.f32 %v707, %v778
      %v833 = vadd.f32 %v708, %v780
      %v834 = vadd.f32 %v709, %v783
      %v835 = vadd.f32 %v710, %v785
      %v836 = vadd.f32 %v711, %v788
      %v837 = vadd.f32 %v712, %v790
      %v838 = vadd.f32 %v713, %v793
      %v839 = vadd.f32 %v714, %v795
      %v840 = vadd.f32 %v715, %v798
      %v841 = vadd.f32 %v716, %v800
      %v842 = vadd.f32 %v717, %v803
      %v843 = vadd.f32 %v718, %v805
      %v844 = vadd.f32 %v719, %v808
      %v845 = vadd.f32 %v720, %v810
      %v846 = vadd.f32 %v721, %v813
      %v847 = vadd.f32 %v722, %v815
      %v848 = vld [vmem:[%s1 + $0x5] sm:$0x1]
      %v849 = vlaneseq
      %v850 = vshrl.u32 %v849, 7
      %v851 = vsub.s32 0, %v850
      %v852 = vrot.slane %v848, %v851
      %v853 = vmul.f32 %v370, %v852
      %v854 = vmul.f32 %v371, %v852
      %v855 = vmul.f32 %v372, %v852
      %v856 = vmul.f32 %v373, %v852
      %v857 = vmul.f32 %v374, %v852
      %v858 = vmul.f32 %v375, %v852
      %v859 = vmul.f32 %v376, %v852
      %v860 = vmul.f32 %v377, %v852
      %v861 = vmul.f32 %v378, %v852
      %v862 = vmul.f32 %v379, %v852
      %v863 = vmul.f32 %v380, %v852
      %v864 = vmul.f32 %v381, %v852
      %v865 = vmul.f32 %v382, %v852
      %v866 = vmul.f32 %v383, %v852
      %v867 = vmul.f32 %v384, %v852
      %v868 = vmul.f32 %v385, %v852
      %v869 = vmul.f32 %v386, %v852
      %v870 = vmul.f32 %v387, %v852
      %v871 = vmul.f32 %v388, %v852
      %v872 = vmul.f32 %v389, %v852
      %v873 = vmul.f32 %v390, %v852
      %v874 = vmul.f32 %v391, %v852
      %v875 = vmul.f32 %v392, %v852
      %v876 = vmul.f32 %v393, %v852
      %v901 = vrot.slane %v853, 2
      %v902 = vrot.slane %v854, 2
      %v903 = vsel %vm613, %v901, %v902
      %v904 = vrot.slane %v855, 2
      %v905 = vsel %vm613, %v902, %v904
      %v906 = vrot.slane %v856, 2
      %v907 = vrot.slane %v857, 2
      %v908 = vsel %vm613, %v906, %v907
      %v909 = vrot.slane %v858, 2
      %v910 = vsel %vm613, %v907, %v909
      %v911 = vrot.slane %v859, 2
      %v912 = vrot.slane %v860, 2
      %v913 = vsel %vm613, %v911, %v912
      %v914 = vrot.slane %v861, 2
      %v915 = vsel %vm613, %v912, %v914
      %v916 = vrot.slane %v862, 2
      %v917 = vrot.slane %v863, 2
      %v918 = vsel %vm613, %v916, %v917
      %v919 = vrot.slane %v864, 2
      %v920 = vsel %vm613, %v917, %v919
      %v921 = vrot.slane %v865, 2
      %v922 = vrot.slane %v866, 2
      %v923 = vsel %vm613, %v921, %v922
      %v924 = vrot.slane %v867, 2
      %v925 = vsel %vm613, %v922, %v924
      %v926 = vrot.slane %v868, 2
      %v927 = vrot.slane %v869, 2
      %v928 = vsel %vm613, %v926, %v927
      %v929 = vrot.slane %v870, 2
      %v930 = vsel %vm613, %v927, %v929
      %v931 = vrot.slane %v871, 2
      %v932 = vrot.slane %v872, 2
      %v933 = vsel %vm613, %v931, %v932
      %v934 = vrot.slane %v873, 2
      %v935 = vsel %vm613, %v932, %v934
      %v936 = vrot.slane %v874, 2
      %v937 = vrot.slane %v875, 2
      %v938 = vsel %vm613, %v936, %v937
      %v939 = vrot.slane %v876, 2
      %v940 = vsel %vm613, %v937, %v939
      %v957 = vadd.f32 %v832, %v903
      %v958 = vadd.f32 %v833, %v905
      %v959 = vadd.f32 %v834, %v908
      %v960 = vadd.f32 %v835, %v910
      %v961 = vadd.f32 %v836, %v913
      %v962 = vadd.f32 %v837, %v915
      %v963 = vadd.f32 %v838, %v918
      %v964 = vadd.f32 %v839, %v920
      %v965 = vadd.f32 %v840, %v923
      %v966 = vadd.f32 %v841, %v925
      %v967 = vadd.f32 %v842, %v928
      %v968 = vadd.f32 %v843, %v930
      %v969 = vadd.f32 %v844, %v933
      %v970 = vadd.f32 %v845, %v935
      %v971 = vadd.f32 %v846, %v938
      %v972 = vadd.f32 %v847, %v940
      %v973 = vld [vmem:[%s1 + $0x6] sm:$0x1]
      %v974 = vlaneseq
      %v975 = vshrl.u32 %v974, 7
      %v976 = vsub.s32 0, %v975
      %v977 = vrot.slane %v973, %v976
      %v978 = vmul.f32 %v373, %v977
      %v979 = vmul.f32 %v374, %v977
      %v980 = vmul.f32 %v376, %v977
      %v981 = vmul.f32 %v377, %v977
      %v982 = vmul.f32 %v379, %v977
      %v983 = vmul.f32 %v380, %v977
      %v984 = vmul.f32 %v382, %v977
      %v985 = vmul.f32 %v383, %v977
      %v986 = vmul.f32 %v385, %v977
      %v987 = vmul.f32 %v386, %v977
      %v988 = vmul.f32 %v388, %v977
      %v989 = vmul.f32 %v389, %v977
      %v990 = vmul.f32 %v391, %v977
      %v991 = vmul.f32 %v392, %v977
      %v992 = vmul.f32 %v394, %v977
      %v993 = vmul.f32 %v395, %v977
      %v994 = vadd.f32 %v957, %v978
      %v995 = vadd.f32 %v958, %v979
      %v996 = vadd.f32 %v959, %v980
      %v997 = vadd.f32 %v960, %v981
      %v998 = vadd.f32 %v961, %v982
      %v999 = vadd.f32 %v962, %v983
      %v1000 = vadd.f32 %v963, %v984
      %v1001 = vadd.f32 %v964, %v985
      %v1002 = vadd.f32 %v965, %v986
      %v1003 = vadd.f32 %v966, %v987
      %v1004 = vadd.f32 %v967, %v988
      %v1005 = vadd.f32 %v968, %v989
      %v1006 = vadd.f32 %v969, %v990
      %v1007 = vadd.f32 %v970, %v991
      %v1008 = vadd.f32 %v971, %v992
      %v1009 = vadd.f32 %v972, %v993
      %v1010 = vld [vmem:[%s1 + $0x7] sm:$0x1]
      %v1011 = vlaneseq
      %v1012 = vshrl.u32 %v1011, 7
      %v1013 = vsub.s32 0, %v1012
      %v1014 = vrot.slane %v1010, %v1013
      %v1015 = vmul.f32 %v373, %v1014
      %v1016 = vmul.f32 %v374, %v1014
      %v1017 = vmul.f32 %v375, %v1014
      %v1018 = vmul.f32 %v376, %v1014
      %v1019 = vmul.f32 %v377, %v1014
      %v1020 = vmul.f32 %v378, %v1014
      %v1021 = vmul.f32 %v379, %v1014
      %v1022 = vmul.f32 %v380, %v1014
      %v1023 = vmul.f32 %v381, %v1014
      %v1024 = vmul.f32 %v382, %v1014
      %v1025 = vmul.f32 %v383, %v1014
      %v1026 = vmul.f32 %v384, %v1014
      %v1027 = vmul.f32 %v385, %v1014
      %v1028 = vmul.f32 %v386, %v1014
      %v1029 = vmul.f32 %v387, %v1014
      %v1030 = vmul.f32 %v388, %v1014
      %v1031 = vmul.f32 %v389, %v1014
      %v1032 = vmul.f32 %v390, %v1014
      %v1033 = vmul.f32 %v391, %v1014
      %v1034 = vmul.f32 %v392, %v1014
      %v1035 = vmul.f32 %v393, %v1014
      %v1036 = vmul.f32 %v394, %v1014
      %v1037 = vmul.f32 %v395, %v1014
      %v1038 = vmul.f32 %v396, %v1014
      %v1063 = vrot.slane %v1015, 1
      %v1064 = vrot.slane %v1016, 1
      %v1065 = vsel %vm487, %v1063, %v1064
      %v1066 = vrot.slane %v1017, 1
      %v1067 = vsel %vm487, %v1064, %v1066
      %v1068 = vrot.slane %v1018, 1
      %v1069 = vrot.slane %v1019, 1
      %v1070 = vsel %vm487, %v1068, %v1069
      %v1071 = vrot.slane %v1020, 1
      %v1072 = vsel %vm487, %v1069, %v1071
      %v1073 = vrot.slane %v1021, 1
      %v1074 = vrot.slane %v1022, 1
      %v1075 = vsel %vm487, %v1073, %v1074
      %v1076 = vrot.slane %v1023, 1
      %v1077 = vsel %vm487, %v1074, %v1076
      %v1078 = vrot.slane %v1024, 1
      %v1079 = vrot.slane %v1025, 1
      %v1080 = vsel %vm487, %v1078, %v1079
      %v1081 = vrot.slane %v1026, 1
      %v1082 = vsel %vm487, %v1079, %v1081
      %v1083 = vrot.slane %v1027, 1
      %v1084 = vrot.slane %v1028, 1
      %v1085 = vsel %vm487, %v1083, %v1084
      %v1086 = vrot.slane %v1029, 1
      %v1087 = vsel %vm487, %v1084, %v1086
      %v1088 = vrot.slane %v1030, 1
      %v1089 = vrot.slane %v1031, 1
      %v1090 = vsel %vm487, %v1088, %v1089
      %v1091 = vrot.slane %v1032, 1
      %v1092 = vsel %vm487, %v1089, %v1091
      %v1093 = vrot.slane %v1033, 1
      %v1094 = vrot.slane %v1034, 1
      %v1095 = vsel %vm487, %v1093, %v1094
      %v1096 = vrot.slane %v1035, 1
      %v1097 = vsel %vm487, %v1094, %v1096
      %v1098 = vrot.slane %v1036, 1
      %v1099 = vrot.slane %v1037, 1
      %v1100 = vsel %vm487, %v1098, %v1099
      %v1101 = vrot.slane %v1038, 1
      %v1102 = vsel %vm487, %v1099, %v1101
      %v1119 = vadd.f32 %v994, %v1065
      %v1120 = vadd.f32 %v995, %v1067
      %v1121 = vadd.f32 %v996, %v1070
      %v1122 = vadd.f32 %v997, %v1072
      %v1123 = vadd.f32 %v998, %v1075
      %v1124 = vadd.f32 %v999, %v1077
      %v1125 = vadd.f32 %v1000, %v1080
      %v1126 = vadd.f32 %v1001, %v1082
      %v1127 = vadd.f32 %v1002, %v1085
      %v1128 = vadd.f32 %v1003, %v1087
      %v1129 = vadd.f32 %v1004, %v1090
      %v1130 = vadd.f32 %v1005, %v1092
      %v1131 = vadd.f32 %v1006, %v1095
      %v1132 = vadd.f32 %v1007, %v1097
      %v1133 = vadd.f32 %v1008, %v1100
      %v1134 = vadd.f32 %v1009, %v1102
      %v1135 = vld [vmem:[%s1 + $0x8] sm:$0x1]
      %v1136 = vlaneseq
      %v1137 = vshrl.u32 %v1136, 7
      %v1138 = vsub.s32 0, %v1137
      %v1139 = vrot.slane %v1135, %v1138
      %v1140 = vmul.f32 %v373, %v1139
      %v1141 = vmul.f32 %v374, %v1139
      %v1142 = vmul.f32 %v375, %v1139
      %v1143 = vmul.f32 %v376, %v1139
      %v1144 = vmul.f32 %v377, %v1139
      %v1145 = vmul.f32 %v378, %v1139
      %v1146 = vmul.f32 %v379, %v1139
      %v1147 = vmul.f32 %v380, %v1139
      %v1148 = vmul.f32 %v381, %v1139
      %v1149 = vmul.f32 %v382, %v1139
      %v1150 = vmul.f32 %v383, %v1139
      %v1151 = vmul.f32 %v384, %v1139
      %v1152 = vmul.f32 %v385, %v1139
      %v1153 = vmul.f32 %v386, %v1139
      %v1154 = vmul.f32 %v387, %v1139
      %v1155 = vmul.f32 %v388, %v1139
      %v1156 = vmul.f32 %v389, %v1139
      %v1157 = vmul.f32 %v390, %v1139
      %v1158 = vmul.f32 %v391, %v1139
      %v1159 = vmul.f32 %v392, %v1139
      %v1160 = vmul.f32 %v393, %v1139
      %v1161 = vmul.f32 %v394, %v1139
      %v1162 = vmul.f32 %v395, %v1139
      %v1163 = vmul.f32 %v396, %v1139
      %v1188 = vrot.slane %v1140, 2
      %v1189 = vrot.slane %v1141, 2
      %v1190 = vsel %vm613, %v1188, %v1189
      %v1191 = vrot.slane %v1142, 2
      %v1192 = vsel %vm613, %v1189, %v1191
      %v1193 = vrot.slane %v1143, 2
      %v1194 = vrot.slane %v1144, 2
      %v1195 = vsel %vm613, %v1193, %v1194
      %v1196 = vrot.slane %v1145, 2
      %v1197 = vsel %vm613, %v1194, %v1196
      %v1198 = vrot.slane %v1146, 2
      %v1199 = vrot.slane %v1147, 2
      %v1200 = vsel %vm613, %v1198, %v1199
      %v1201 = vrot.slane %v1148, 2
      %v1202 = vsel %vm613, %v1199, %v1201
      %v1203 = vrot.slane %v1149, 2
      %v1204 = vrot.slane %v1150, 2
      %v1205 = vsel %vm613, %v1203, %v1204
      %v1206 = vrot.slane %v1151, 2
      %v1207 = vsel %vm613, %v1204, %v1206
      %v1208 = vrot.slane %v1152, 2
      %v1209 = vrot.slane %v1153, 2
      %v1210 = vsel %vm613, %v1208, %v1209
      %v1211 = vrot.slane %v1154, 2
      %v1212 = vsel %vm613, %v1209, %v1211
      %v1213 = vrot.slane %v1155, 2
      %v1214 = vrot.slane %v1156, 2
      %v1215 = vsel %vm613, %v1213, %v1214
      %v1216 = vrot.slane %v1157, 2
      %v1217 = vsel %vm613, %v1214, %v1216
      %v1218 = vrot.slane %v1158, 2
      %v1219 = vrot.slane %v1159, 2
      %v1220 = vsel %vm613, %v1218, %v1219
      %v1221 = vrot.slane %v1160, 2
      %v1222 = vsel %vm613, %v1219, %v1221
      %v1223 = vrot.slane %v1161, 2
      %v1224 = vrot.slane %v1162, 2
      %v1225 = vsel %vm613, %v1223, %v1224
      %v1226 = vrot.slane %v1163, 2
      %v1227 = vsel %vm613, %v1224, %v1226
      %v1244 = vadd.f32 %v1119, %v1190
      %v1245 = vadd.f32 %v1120, %v1192
      %v1246 = vadd.f32 %v1121, %v1195
      %v1247 = vadd.f32 %v1122, %v1197
      %v1248 = vadd.f32 %v1123, %v1200
      %v1249 = vadd.f32 %v1124, %v1202
      %v1250 = vadd.f32 %v1125, %v1205
      %v1251 = vadd.f32 %v1126, %v1207
      %v1252 = vadd.f32 %v1127, %v1210
      %v1253 = vadd.f32 %v1128, %v1212
      %v1254 = vadd.f32 %v1129, %v1215
      %v1255 = vadd.f32 %v1130, %v1217
      %v1256 = vadd.f32 %v1131, %v1220
      %v1257 = vadd.f32 %v1132, %v1222
      %v1258 = vadd.f32 %v1133, %v1225
      %v1259 = vadd.f32 %v1134, %v1227
      %v1260 = vld [vmem:[%s2] sm:$0x1]
      %v1262 = vlaneseq
      %v1263 = vshrl.u32 %v1262, 7
      %v1264 = vsub.s32 0, %v1263
      %v1265 = vrot.slane %v1260, %v1264
      %v1267 = vmul.f32 %v1244, %v1265
      %v1268 = vmul.f32 %v1245, %v1265
      %v1269 = vmul.f32 %v1246, %v1265
      %v1270 = vmul.f32 %v1247, %v1265
      %v1271 = vmul.f32 %v1248, %v1265
      %v1272 = vmul.f32 %v1249, %v1265
      %v1273 = vmul.f32 %v1250, %v1265
      %v1274 = vmul.f32 %v1251, %v1265
      %v1275 = vmul.f32 %v1252, %v1265
      %v1276 = vmul.f32 %v1253, %v1265
      %v1277 = vmul.f32 %v1254, %v1265
      %v1278 = vmul.f32 %v1255, %v1265
      %v1279 = vmul.f32 %v1256, %v1265
      %v1280 = vmul.f32 %v1257, %v1265
      %v1281 = vmul.f32 %v1258, %v1265
      %v1282 = vmul.f32 %v1259, %v1265
      %v1283 = vld [vmem:[%s3] sm:$0x1]
      %v1285 = vlaneseq
      %v1286 = vshrl.u32 %v1285, 7
      %v1287 = vsub.s32 0, %v1286
      %v1288 = vrot.slane %v1283, %v1287
      %v1290 = vadd.f32 %v1267, %v1288
      %v1291 = vadd.f32 %v1268, %v1288
      %v1292 = vadd.f32 %v1269, %v1288
      %v1293 = vadd.f32 %v1270, %v1288
      %v1294 = vadd.f32 %v1271, %v1288
      %v1295 = vadd.f32 %v1272, %v1288
      %v1296 = vadd.f32 %v1273, %v1288
      %v1297 = vadd.f32 %v1274, %v1288
      %v1298 = vadd.f32 %v1275, %v1288
      %v1299 = vadd.f32 %v1276, %v1288
      %v1300 = vadd.f32 %v1277, %v1288
      %v1301 = vadd.f32 %v1278, %v1288
      %v1302 = vadd.f32 %v1279, %v1288
      %v1303 = vadd.f32 %v1280, %v1288
      %v1304 = vadd.f32 %v1281, %v1288
      %v1305 = vadd.f32 %v1282, %v1288
      %v1306 = vmax.f32 %v1290, 0.0
      %v1307 = vmax.f32 %v1291, 0.0
      %v1308 = vmax.f32 %v1292, 0.0
      %v1309 = vmax.f32 %v1293, 0.0
      %v1310 = vmax.f32 %v1294, 0.0
      %v1311 = vmax.f32 %v1295, 0.0
      %v1312 = vmax.f32 %v1296, 0.0
      %v1313 = vmax.f32 %v1297, 0.0
      %v1314 = vmax.f32 %v1298, 0.0
      %v1315 = vmax.f32 %v1299, 0.0
      %v1316 = vmax.f32 %v1300, 0.0
      %v1317 = vmax.f32 %v1301, 0.0
      %v1318 = vmax.f32 %v1302, 0.0
      %v1319 = vmax.f32 %v1303, 0.0
      %v1320 = vmax.f32 %v1304, 0.0
      %v1321 = vmax.f32 %v1305, 0.0
      %v1322 = vld [vmem:[%s4] sm:$0xff]
      %v1323 = vld [vmem:[%s4 + $0x8] sm:$0xff]
      %v1324 = vld [vmem:[%s4 + $0x10] sm:$0xff]
      %v1325 = vld [vmem:[%s4 + $0x18] sm:$0xf]
      %vm1326 = vcmask 228352
      %v1328 = vsel %vm1326, %v1306, 0
      %v1331 = vsel %vm1326, %v1307, 0
      %v1334 = vsel %vm1326, %v1308, 0
      %v1337 = vsel %vm1326, %v1309, 0
      %v1340 = vsel %vm1326, %v1310, 0
      %v1343 = vsel %vm1326, %v1311, 0
      %v1346 = vsel %vm1326, %v1312, 0
      %v1349 = vsel %vm1326, %v1313, 0
      %v1352 = vsel %vm1326, %v1314, 0
      %v1355 = vsel %vm1326, %v1315, 0
      %v1358 = vsel %vm1326, %v1316, 0
      %v1361 = vsel %vm1326, %v1317, 0
      %v1364 = vsel %vm1326, %v1318, 0
      %v1367 = vsel %vm1326, %v1319, 0
      %v1370 = vsel %vm1326, %v1320, 0
      %v1373 = vsel %vm1326, %v1321, 0
      %vm1375 = vcmask 1043456
      %v1377 = vsel %vm1375, %v1325, 0
      %1379 = vmatprep.subr.mxu0 0.0
      %1380 = vmatpush1.msra.mxu0 %v1322
      %1381 = vmatprep.subr.mxu0 0.0
      %1382 = vmatpush1.msra.mxu0 %v1323
      %1383 = vmatprep.subr.mxu0 0.0
      %1384 = vmatpush1.msra.mxu0 %v1324
      %1385 = vmatprep.subr.mxu0 0.0
      %1386 = vmatpush1.msra.mxu0 %v1377
      %1387 = vmatprep.subr.mxu0 0.0
      %1388 = vmatpush1.msra.mxu0 0.0
      %1389 = vmatprep.subr.mxu0 0.0
      %1390 = vmatpush1.msra.mxu0 0.0
      %1391 = vmatprep.subr.mxu0 0.0
      %1392 = vmatpush1.msra.mxu0 0.0
      %1393 = vmatprep.subr.mxu0 0.0
      %1394 = vmatpush1.msra.mxu0 0.0
      %1395 = vmatprep.subr.mxu0 0.0
      %1396 = vmatpush1.msra.mxu0 0.0
      %1397 = vmatprep.subr.mxu0 0.0
      %1398 = vmatpush1.msra.mxu0 0.0
      %1399 = vmatprep.subr.mxu0 0.0
      %1400 = vmatpush1.msra.mxu0 0.0
      %1401 = vmatprep.subr.mxu0 0.0
      %1402 = vmatpush1.msra.mxu0 0.0
      %1403 = vmatprep.subr.mxu0 0.0
      %1404 = vmatpush1.msra.mxu0 0.0
      %1405 = vmatprep.subr.mxu0 0.0
      %1406 = vmatpush1.msra.mxu0 0.0
      %1407 = vmatprep.subr.mxu0 0.0
      %1408 = vmatpush1.msra.mxu0 0.0
      %1409 = vmatprep.subr.mxu0 0.0
      %1410 = vmatpush1.msra.mxu0 0.0
      %1411 = vmatprep.subr.mxu0 0.0
      %1412 = vmatpush1.msra.mxu0 0.0
      %1413 = vmatprep.subr.mxu0 0.0
      %1414 = vmatpush1.msra.mxu0 0.0
      %1415 = vmatprep.subr.mxu0 0.0
      %1416 = vmatpush1.msra.mxu0 0.0
      %1417 = vmatprep.subr.mxu0 0.0
      %1418 = vmatpush1.msra.mxu0 0.0
      %1419 = vmatprep.subr.mxu0 0.0
      %1420 = vmatpush1.msra.mxu0 0.0
      %1421 = vmatprep.subr.mxu0 0.0
      %1422 = vmatpush1.msra.mxu0 0.0
      %1423 = vmatprep.subr.mxu0 0.0
      %1424 = vmatpush1.msra.mxu0 0.0
      %1425 = vmatprep.subr.mxu0 0.0
      %1426 = vmatpush1.msra.mxu0 0.0
      %1427 = vmatprep.subr.mxu0 0.0
      %1428 = vmatpush1.msra.mxu0 0.0
      %1429 = vmatprep.subr.mxu0 0.0
      %1430 = vmatpush1.msra.mxu0 0.0
      %1431 = vmatprep.subr.mxu0 0.0
      %1432 = vmatpush1.msra.mxu0 0.0
      %1433 = vmatprep.subr.mxu0 0.0
      %1434 = vmatpush1.msra.mxu0 0.0
      %1435 = vmatprep.subr.mxu0 0.0
      %1436 = vmatpush1.msra.mxu0 0.0
      %1437 = vmatprep.subr.mxu0 0.0
      %1438 = vmatpush1.msra.mxu0 0.0
      %1439 = vmatprep.subr.mxu0 0.0
      %1440 = vmatpush1.msra.mxu0 0.0
      %1441 = vmatprep.subr.mxu0 0.0
      %1442 = vmatpush1.msra.mxu0 0.0
      %1443 = vmatprep.mubr.f32.mxu0 0.0
      %1444 = vmatmul.mubr.f32.gmra.mrb[0].mxu0 %v1328
      %v1445 = vpop.f32.mrb[0].mxu0
      %v1446 = vadd.f32 0.0, %v1445
      %v1447 = vpop.f32.mrb[0].mxu0
      %1448 = vmatprep.mubr.f32.mxu0 0.0
      %1449 = vmatmul.mubr.f32.gmra.mrb[0].mxu0 %v1331
      %v1450 = vpop.f32.mrb[0].mxu0
      %v1451 = vadd.f32 0.0, %v1450
      %v1452 = vpop.f32.mrb[0].mxu0
      %1453 = vmatprep.mubr.f32.mxu0 0.0
      %1454 = vmatmul.mubr.f32.gmra.mrb[0].mxu0 %v1334
      %v1455 = vpop.f32.mrb[0].mxu0
      %v1456 = vadd.f32 0.0, %v1455
      %v1457 = vpop.f32.mrb[0].mxu0
      %1458 = vmatprep.mubr.f32.mxu0 0.0
      %1459 = vmatmul.mubr.f32.gmra.mrb[0].mxu0 %v1337
      %v1460 = vpop.f32.mrb[0].mxu0
      %v1461 = vadd.f32 0.0, %v1460
      %v1462 = vpop.f32.mrb[0].mxu0
      %1463 = vmatprep.mubr.f32.mxu0 0.0
      %1464 = vmatmul.mubr.f32.gmra.mrb[0].mxu0 %v1340
      %v1465 = vpop.f32.mrb[0].mxu0
      %v1466 = vadd.f32 0.0, %v1465
      %v1467 = vpop.f32.mrb[0].mxu0
      %1468 = vmatprep.mubr.f32.mxu0 0.0
      %1469 = vmatmul.mubr.f32.gmra.mrb[0].mxu0 %v1343
      %v1470 = vpop.f32.mrb[0].mxu0
      %v1471 = vadd.f32 0.0, %v1470
      %v1472 = vpop.f32.mrb[0].mxu0
      %1473 = vmatprep.mubr.f32.mxu0 0.0
      %1474 = vmatmul.mubr.f32.gmra.mrb[0].mxu0 %v1346
      %v1475 = vpop.f32.mrb[0].mxu0
      %v1476 = vadd.f32 0.0, %v1475
      %v1477 = vpop.f32.mrb[0].mxu0
      %1478 = vmatprep.mubr.f32.mxu0 0.0
      %1479 = vmatmul.mubr.f32.gmra.mrb[0].mxu0 %v1349
      %v1480 = vpop.f32.mrb[0].mxu0
      %v1481 = vadd.f32 0.0, %v1480
      %v1482 = vpop.f32.mrb[0].mxu0
      %1483 = vmatprep.mubr.f32.mxu0 0.0
      %1484 = vmatmul.mubr.f32.gmra.mrb[0].mxu0 %v1352
      %v1485 = vpop.f32.mrb[0].mxu0
      %v1486 = vadd.f32 0.0, %v1485
      %v1487 = vpop.f32.mrb[0].mxu0
      %1488 = vmatprep.mubr.f32.mxu0 0.0
      %1489 = vmatmul.mubr.f32.gmra.mrb[0].mxu0 %v1355
      %v1490 = vpop.f32.mrb[0].mxu0
      %v1491 = vadd.f32 0.0, %v1490
      %v1492 = vpop.f32.mrb[0].mxu0
      %1493 = vmatprep.mubr.f32.mxu0 0.0
      %1494 = vmatmul.mubr.f32.gmra.mrb[0].mxu0 %v1358
      %v1495 = vpop.f32.mrb[0].mxu0
      %v1496 = vadd.f32 0.0, %v1495
      %v1497 = vpop.f32.mrb[0].mxu0
      %1498 = vmatprep.mubr.f32.mxu0 0.0
      %1499 = vmatmul.mubr.f32.gmra.mrb[0].mxu0 %v1361
      %v1500 = vpop.f32.mrb[0].mxu0
      %v1501 = vadd.f32 0.0, %v1500
      %v1502 = vpop.f32.mrb[0].mxu0
      %1503 = vmatprep.mubr.f32.mxu0 0.0
      %1504 = vmatmul.mubr.f32.gmra.mrb[0].mxu0 %v1364
      %v1505 = vpop.f32.mrb[0].mxu0
      %v1506 = vadd.f32 0.0, %v1505
      %v1507 = vpop.f32.mrb[0].mxu0
      %1508 = vmatprep.mubr.f32.mxu0 0.0
      %1509 = vmatmul.mubr.f32.gmra.mrb[0].mxu0 %v1367
      %v1510 = vpop.f32.mrb[0].mxu0
      %v1511 = vadd.f32 0.0, %v1510
      %v1512 = vpop.f32.mrb[0].mxu0
      %1513 = vmatprep.mubr.f32.mxu0 0.0
      %1514 = vmatmul.mubr.f32.gmra.mrb[0].mxu0 %v1370
      %v1515 = vpop.f32.mrb[0].mxu0
      %v1516 = vadd.f32 0.0, %v1515
      %v1517 = vpop.f32.mrb[0].mxu0
      %1518 = vmatprep.mubr.f32.mxu0 0.0
      %1519 = vmatmul.mubr.f32.gmra.mrb[0].mxu0 %v1373
      %v1520 = vpop.f32.mrb[0].mxu0
      %v1521 = vadd.f32 0.0, %v1520
      %v1522 = vpop.f32.mrb[0].mxu0
      %1523 = vdwg.mxu0
      %v1524 = vld [vmem:[%s5] sm:$0x1]
      %v1526 = vlaneseq
      %v1527 = vshrl.u32 %v1526, 7
      %v1528 = vsub.s32 0, %v1527
      %v1529 = vrot.slane %v1524, %v1528
      %v1531 = vmul.f32 %v1446, %v1529
      %v1532 = vmul.f32 %v1451, %v1529
      %v1533 = vmul.f32 %v1456, %v1529
      %v1534 = vmul.f32 %v1461, %v1529
      %v1535 = vmul.f32 %v1466, %v1529
      %v1536 = vmul.f32 %v1471, %v1529
      %v1537 = vmul.f32 %v1476, %v1529
      %v1538 = vmul.f32 %v1481, %v1529
      %v1539 = vmul.f32 %v1486, %v1529
      %v1540 = vmul.f32 %v1491, %v1529
      %v1541 = vmul.f32 %v1496, %v1529
      %v1542 = vmul.f32 %v1501, %v1529
      %v1543 = vmul.f32 %v1506, %v1529
      %v1544 = vmul.f32 %v1511, %v1529
      %v1545 = vmul.f32 %v1516, %v1529
      %v1546 = vmul.f32 %v1521, %v1529
      %v1547 = vld [vmem:[%s6] sm:$0x1]
      %v1549 = vlaneseq
      %v1550 = vshrl.u32 %v1549, 7
      %v1551 = vsub.s32 0, %v1550
      %v1552 = vrot.slane %v1547, %v1551
      %v1554 = vadd.f32 %v1531, %v1552
      %v1555 = vadd.f32 %v1532, %v1552
      %v1556 = vadd.f32 %v1533, %v1552
      %v1557 = vadd.f32 %v1534, %v1552
      %v1558 = vadd.f32 %v1535, %v1552
      %v1559 = vadd.f32 %v1536, %v1552
      %v1560 = vadd.f32 %v1537, %v1552
      %v1561 = vadd.f32 %v1538, %v1552
      %v1562 = vadd.f32 %v1539, %v1552
      %v1563 = vadd.f32 %v1540, %v1552
      %v1564 = vadd.f32 %v1541, %v1552
      %v1565 = vadd.f32 %v1542, %v1552
      %v1566 = vadd.f32 %v1543, %v1552
      %v1567 = vadd.f32 %v1544, %v1552
      %v1568 = vadd.f32 %v1545, %v1552
      %v1569 = vadd.f32 %v1546, %v1552
      %v1570 = vmax.f32 %v1554, 0.0
      %v1571 = vmax.f32 %v1555, 0.0
      %v1572 = vmax.f32 %v1556, 0.0
      %v1573 = vmax.f32 %v1557, 0.0
      %v1574 = vmax.f32 %v1558, 0.0
      %v1575 = vmax.f32 %v1559, 0.0
      %v1576 = vmax.f32 %v1560, 0.0
      %v1577 = vmax.f32 %v1561, 0.0
      %v1578 = vmax.f32 %v1562, 0.0
      %v1579 = vmax.f32 %v1563, 0.0
      %v1580 = vmax.f32 %v1564, 0.0
      %v1581 = vmax.f32 %v1565, 0.0
      %v1582 = vmax.f32 %v1566, 0.0
      %v1583 = vmax.f32 %v1567, 0.0
      %v1584 = vmax.f32 %v1568, 0.0
      %v1585 = vmax.f32 %v1569, 0.0
      %v1586 = vld [vmem:[%s7] sm:$0xff]
      %v1587 = vld [vmem:[%s7 + $0x8] sm:$0xff]
      %v1588 = vld [vmem:[%s7 + $0x10] sm:$0xff]
      %v1589 = vld [vmem:[%s7 + $0x18] sm:$0xff]
      %v1590 = vld [vmem:[%s8] sm:$0x1]
      %v1592 = vlaneseq
      %v1593 = vshrl.u32 %v1592, 7
      %v1594 = vsub.s32 0, %v1593
      %v1595 = vrot.slane %v1590, %v1594
      %vm1597 = vcmask 261120
      %v1599 = vsel %vm1597, %v1570, 0
      %v1602 = vsel %vm1597, %v1571, 0
      %v1605 = vsel %vm1597, %v1572, 0
      %v1608 = vsel %vm1597, %v1573, 0
      %v1611 = vsel %vm1597, %v1574, 0
      %v1614 = vsel %vm1597, %v1575, 0
      %v1617 = vsel %vm1597, %v1576, 0
      %v1620 = vsel %vm1597, %v1577, 0
      %v1623 = vsel %vm1597, %v1578, 0
      %v1626 = vsel %vm1597, %v1579, 0
      %v1629 = vsel %vm1597, %v1580, 0
      %v1632 = vsel %vm1597, %v1581, 0
      %v1635 = vsel %vm1597, %v1582, 0
      %v1638 = vsel %vm1597, %v1583, 0
      %v1641 = vsel %vm1597, %v1584, 0
      %v1644 = vsel %vm1597, %v1585, 0
      %1646 = vmatprep.subr.mxu0 0.0
      %1647 = vmatpush1.msra.mxu0 %v1586
      %1648 = vmatprep.subr.mxu0 0.0
      %1649 = vmatpush1.msra.mxu0 %v1587
      %1650 = vmatprep.subr.mxu0 0.0
      %1651 = vmatpush1.msra.mxu0 %v1588
      %1652 = vmatprep.subr.mxu0 0.0
      %1653 = vmatpush1.msra.mxu0 %v1589
      %1654 = vmatprep.subr.mxu0 0.0
      %1655 = vmatpush1.msra.mxu0 0.0
      %1656 = vmatprep.subr.mxu0 0.0
      %1657 = vmatpush1.msra.mxu0 0.0
      %1658 = vmatprep.subr.mxu0 0.0
      %1659 = vmatpush1.msra.mxu0 0.0
      %1660 = vmatprep.subr.mxu0 0.0
      %1661 = vmatpush1.msra.mxu0 0.0
      %1662 = vmatprep.subr.mxu0 0.0
      %1663 = vmatpush1.msra.mxu0 0.0
      %1664 = vmatprep.subr.mxu0 0.0
      %1665 = vmatpush1.msra.mxu0 0.0
      %1666 = vmatprep.subr.mxu0 0.0
      %1667 = vmatpush1.msra.mxu0 0.0
      %1668 = vmatprep.subr.mxu0 0.0
      %1669 = vmatpush1.msra.mxu0 0.0
      %1670 = vmatprep.subr.mxu0 0.0
      %1671 = vmatpush1.msra.mxu0 0.0
      %1672 = vmatprep.subr.mxu0 0.0
      %1673 = vmatpush1.msra.mxu0 0.0
      %1674 = vmatprep.subr.mxu0 0.0
      %1675 = vmatpush1.msra.mxu0 0.0
      %1676 = vmatprep.subr.mxu0 0.0
      %1677 = vmatpush1.msra.mxu0 0.0
      %1678 = vmatprep.subr.mxu0 0.0
      %1679 = vmatpush1.msra.mxu0 0.0
      %1680 = vmatprep.subr.mxu0 0.0
      %1681 = vmatpush1.msra.mxu0 0.0
      %1682 = vmatprep.subr.mxu0 0.0
      %1683 = vmatpush1.msra.mxu0 0.0
      %1684 = vmatprep.subr.mxu0 0.0
      %1685 = vmatpush1.msra.mxu0 0.0
      %1686 = vmatprep.subr.mxu0 0.0
      %1687 = vmatpush1.msra.mxu0 0.0
      %1688 = vmatprep.subr.mxu0 0.0
      %1689 = vmatpush1.msra.mxu0 0.0
      %1690 = vmatprep.subr.mxu0 0.0
      %1691 = vmatpush1.msra.mxu0 0.0
      %1692 = vmatprep.subr.mxu0 0.0
      %1693 = vmatpush1.msra.mxu0 0.0
      %1694 = vmatprep.subr.mxu0 0.0
      %1695 = vmatpush1.msra.mxu0 0.0
      %1696 = vmatprep.subr.mxu0 0.0
      %1697 = vmatpush1.msra.mxu0 0.0
      %1698 = vmatprep.subr.mxu0 0.0
      %1699 = vmatpush1.msra.mxu0 0.0
      %1700 = vmatprep.subr.mxu0 0.0
      %1701 = vmatpush1.msra.mxu0 0.0
      %1702 = vmatprep.subr.mxu0 0.0
      %1703 = vmatpush1.msra.mxu0 0.0
      %1704 = vmatprep.subr.mxu0 0.0
      %1705 = vmatpush1.msra.mxu0 0.0
      %1706 = vmatprep.subr.mxu0 0.0
      %1707 = vmatpush1.msra.mxu0 0.0
      %1708 = vmatprep.subr.mxu0 0.0
      %1709 = vmatpush1.msra.mxu0 0.0
      %1710 = vmatprep.mubr.f32.mxu0 0.0
      %1711 = vmatmul.mubr.f32.gmra.mrb[0].mxu0 %v1599
      %v1712 = vpop.f32.mrb[0].mxu0
      %v1713 = vadd.f32 %v1595, %v1712
      %v1714 = vpop.f32.mrb[0].mxu0
      %1715 = vmatprep.mubr.f32.mxu0 0.0
      %1716 = vmatmul.mubr.f32.gmra.mrb[0].mxu0 %v1602
      %v1717 = vpop.f32.mrb[0].mxu0
      %v1718 = vadd.f32 %v1595, %v1717
      %v1719 = vpop.f32.mrb[0].mxu0
      %1720 = vmatprep.mubr.f32.mxu0 0.0
      %1721 = vmatmul.mubr.f32.gmra.mrb[0].mxu0 %v1605
      %v1722 = vpop.f32.mrb[0].mxu0
      %v1723 = vadd.f32 %v1595, %v1722
      %v1724 = vpop.f32.mrb[0].mxu0
      %1725 = vmatprep.mubr.f32.mxu0 0.0
      %1726 = vmatmul.mubr.f32.gmra.mrb[0].mxu0 %v1608
      %v1727 = vpop.f32.mrb[0].mxu0
      %v1728 = vadd.f32 %v1595, %v1727
      %v1729 = vpop.f32.mrb[0].mxu0
      %1730 = vmatprep.mubr.f32.mxu0 0.0
      %1731 = vmatmul.mubr.f32.gmra.mrb[0].mxu0 %v1611
      %v1732 = vpop.f32.mrb[0].mxu0
      %v1733 = vadd.f32 %v1595, %v1732
      %v1734 = vpop.f32.mrb[0].mxu0
      %1735 = vmatprep.mubr.f32.mxu0 0.0
      %1736 = vmatmul.mubr.f32.gmra.mrb[0].mxu0 %v1614
      %v1737 = vpop.f32.mrb[0].mxu0
      %v1738 = vadd.f32 %v1595, %v1737
      %v1739 = vpop.f32.mrb[0].mxu0
      %1740 = vmatprep.mubr.f32.mxu0 0.0
      %1741 = vmatmul.mubr.f32.gmra.mrb[0].mxu0 %v1617
      %v1742 = vpop.f32.mrb[0].mxu0
      %v1743 = vadd.f32 %v1595, %v1742
      %v1744 = vpop.f32.mrb[0].mxu0
      %1745 = vmatprep.mubr.f32.mxu0 0.0
      %1746 = vmatmul.mubr.f32.gmra.mrb[0].mxu0 %v1620
      %v1747 = vpop.f32.mrb[0].mxu0
      %v1748 = vadd.f32 %v1595, %v1747
      %v1749 = vpop.f32.mrb[0].mxu0
      %1750 = vmatprep.mubr.f32.mxu0 0.0
      %1751 = vmatmul.mubr.f32.gmra.mrb[0].mxu0 %v1623
      %v1752 = vpop.f32.mrb[0].mxu0
      %v1753 = vadd.f32 %v1595, %v1752
      %v1754 = vpop.f32.mrb[0].mxu0
      %1755 = vmatprep.mubr.f32.mxu0 0.0
      %1756 = vmatmul.mubr.f32.gmra.mrb[0].mxu0 %v1626
      %v1757 = vpop.f32.mrb[0].mxu0
      %v1758 = vadd.f32 %v1595, %v1757
      %v1759 = vpop.f32.mrb[0].mxu0
      %1760 = vmatprep.mubr.f32.mxu0 0.0
      %1761 = vmatmul.mubr.f32.gmra.mrb[0].mxu0 %v1629
      %v1762 = vpop.f32.mrb[0].mxu0
      %v1763 = vadd.f32 %v1595, %v1762
      %v1764 = vpop.f32.mrb[0].mxu0
      %1765 = vmatprep.mubr.f32.mxu0 0.0
      %1766 = vmatmul.mubr.f32.gmra.mrb[0].mxu0 %v1632
      %v1767 = vpop.f32.mrb[0].mxu0
      %v1768 = vadd.f32 %v1595, %v1767
      %v1769 = vpop.f32.mrb[0].mxu0
      %1770 = vmatprep.mubr.f32.mxu0 0.0
      %1771 = vmatmul.mubr.f32.gmra.mrb[0].mxu0 %v1635
      %v1772 = vpop.f32.mrb[0].mxu0
      %v1773 = vadd.f32 %v1595, %v1772
      %v1774 = vpop.f32.mrb[0].mxu0
      %1775 = vmatprep.mubr.f32.mxu0 0.0
      %1776 = vmatmul.mubr.f32.gmra.mrb[0].mxu0 %v1638
      %v1777 = vpop.f32.mrb[0].mxu0
      %v1778 = vadd.f32 %v1595, %v1777
      %v1779 = vpop.f32.mrb[0].mxu0
      %1780 = vmatprep.mubr.f32.mxu0 0.0
      %1781 = vmatmul.mubr.f32.gmra.mrb[0].mxu0 %v1641
      %v1782 = vpop.f32.mrb[0].mxu0
      %v1783 = vadd.f32 %v1595, %v1782
      %v1784 = vpop.f32.mrb[0].mxu0
      %1785 = vmatprep.mubr.f32.mxu0 0.0
      %1786 = vmatmul.mubr.f32.gmra.mrb[0].mxu0 %v1644
      %v1787 = vpop.f32.mrb[0].mxu0
      %v1788 = vadd.f32 %v1595, %v1787
      %v1789 = vpop.f32.mrb[0].mxu0
      %1790 = vdwg.mxu0
      %1791 = vxpose.xlu0.b32.start [1/16] %v1713, 128
      %1792 = vxpose.xlu0.b32.cont [2/16] %v1718, 128
      %1793 = vxpose.xlu0.b32.cont [3/16] %v1723, 128
      %1794 = vxpose.xlu0.b32.cont [4/16] %v1728, 128
      %1795 = vxpose.xlu0.b32.cont [5/16] %v1733, 128
      %1796 = vxpose.xlu0.b32.cont [6/16] %v1738, 128
      %1797 = vxpose.xlu0.b32.cont [7/16] %v1743, 128
      %1798 = vxpose.xlu0.b32.cont [8/16] %v1748, 128
      %1799 = vxpose.xlu0.b32.cont [9/16] %v1753, 128
      %1800 = vxpose.xlu0.b32.cont [10/16] %v1758, 128
      %1801 = vxpose.xlu0.b32.cont [11/16] %v1763, 128
      %1802 = vxpose.xlu0.b32.cont [12/16] %v1768, 128
      %1803 = vxpose.xlu0.b32.cont [13/16] %v1773, 128
      %1804 = vxpose.xlu0.b32.cont [14/16] %v1778, 128
      %1805 = vxpose.xlu0.b32.cont [15/16] %v1783, 128
      %1806 = vxpose.xlu0.b32.end [16/16] %v1788, 128
      %v1807 = vpop.trf.xlu0
      %v1808 = vpop.trf.xlu0
      %v1809 = vpop.trf.xlu0
      %v1810 = vpop.trf.xlu0
      %v1811 = vpop.trf.xlu0
      %v1812 = vpop.trf.xlu0
      %v1813 = vpop.trf.xlu0
      %v1814 = vpop.trf.xlu0
      %v1815 = vpop.trf.xlu0
      %v1816 = vpop.trf.xlu0
      %v1817 = vpop.trf.xlu0
      %v1818 = vpop.trf.xlu0
      %v1819 = vpop.trf.xlu0
      %v1820 = vpop.trf.xlu0
      %v1821 = vpop.trf.xlu0
      %v1822 = vpop.trf.xlu0
      %1823 = vst [vmem:[%s366] sm:$0x1f] %v1807
      %p1824 = scmp.lt.s32.totalorder %s24, 1
      %s1825 = scalar_select %p1824, %s24, 1
      %p1826 = scmp.lt.s32.totalorder %s25, 1
      %s1827 = scalar_select %p1826, %s25, 1
      %s1828 = smul.addr %s1825, 2
      %s1829 = sadd.s32 %s1827, %s1828
      %s1830 = smul.addr %s1829, 8
      %s1831 = scalar_lea.vmem %s9, %s1830
      // Predicated region
      $region57: #{tpu_custom_call.1} parent=55 // pred_check
        %p1832 = pneg %p250
      $region58: #{tpu_custom_call.1} parent=55 // pred_check_branch
        %1834 = sbr.rel (%p1832) target = $region60
      $region59: #{tpu_custom_call.1} parent=55 // pred_region
        _
      $region60: #{tpu_custom_call.1} parent=55 // pred_fallthru
        _
    $region56: #{tpu_custom_call.1} parent=5 // pred_fallthru
      _
    %p1835 = scmp.le.s32.totalorder 2, %s15
    // Predicated region
    $region61: #{tpu_custom_call.1} parent=5 // pred_check
      %p1836 = pneg %p1835
    $region62: #{tpu_custom_call.1} parent=5 // pred_check_branch
      %1838 = sbr.rel (%p1836) target = $region64
    $region63: #{tpu_custom_call.1} parent=5 // pred_region
      %s1839 = ssub.s32 %s15, 2
      // Predicated region
      $region65: #{tpu_custom_call.1} parent=63 // pred_check
        %p1840 = pneg %p256
      $region66: #{tpu_custom_call.1} parent=63 // pred_check_branch
        %1842 = sbr.rel (%p1840) target = $region68
      $region67: #{tpu_custom_call.1} parent=63 // pred_region
        %p1843 = scmp.lt.s32.totalorder %s26, 1
        %s1844 = scalar_select %p1843, %s26, 1
        %p1845 = scmp.lt.s32.totalorder %s27, 1
        %s1846 = scalar_select %p1845, %s27, 1
        %s1847 = smul.addr %s1844, 2
        %s1848 = sadd.s32 %s1846, %s1847
        %s1849 = smul.addr %s1848, 8
        %s1850 = scalar_lea.vmem %s9, %s1849
      $region68: #{tpu_custom_call.1} parent=63 // pred_fallthru
        _
    $region64: #{tpu_custom_call.1} parent=5 // pred_fallthru
      _
  $region6: #{tpu_custom_call.1} parent=0 // loop_footer
    %s19 = sadd.s32 1, %s15
  $region7: #{tpu_custom_call.1} parent=0 // loop_footer_branch
    %14 = sbr.rel target = $region3
  $region8: #{tpu_custom_call.1} parent=0 // loop_exit
    _

</llo_original>
